<compile_context>
chip_gen: v7x
topology: tpu7x:2x2x1
jax: 0.10.0
libtpu: 0.0.40
codegen_flags: <defaults>
</compile_context>

<pallas_src>
import jax
import jax.numpy as jnp
from jax.experimental import pallas as pl
from jax.experimental.pallas import tpu as pltpu


def _sage_kernel(adj_ref, feat_ref, w_mp_ref, w_old_ref, bias_ref, out_ref):
    """One block of Gb graphs per grid step.

    adj_ref:   [Gb, N, N]  adjacency (0/1, self-loops expected), bf16/f32
    feat_ref:  [Gb, N, F]  node features
    w_mp_ref:  [F, F]      weight.T[:F]  (acts on the mean-aggregated part)
    w_old_ref: [F, F]      weight.T[F:]  (acts on the original features)
    bias_ref:  [1, F]
    out_ref:   [Gb, N, F]
    """
    gb, n, f = feat_ref.shape

    # Flatten the graph axis into the matmul M axis.  This only merges leading
    # dims (lane dim F untouched) -> cheap, well-supported relayout.
    feat2d = feat_ref[...].reshape(gb * n, f)
    adj = adj_ref[...].astype(jnp.float32)          # exact for 0/1 adjacency

    # Two MXU dots sharing one (Gb*N, F) LHS (instead of one dot into a
    # [.., 2F] result sliced at a non-128-aligned lane offset).
    y_mp = jnp.dot(feat2d, w_mp_ref[...], preferred_element_type=jnp.float32)
    y_old = jnp.dot(feat2d, w_old_ref[...], preferred_element_type=jnp.float32)

    # Per-graph neighbour aggregation: batched (block-diagonal) matmul.
    y_mp3 = y_mp.reshape(gb, n, f)
    nbr = jnp.einsum("gij,gjf->gif", adj, y_mp3,
                     preferred_element_type=jnp.float32)

    # MeanAggregator degree; per-row scaling commutes past the weight matmul:
    #   ((adj @ feat) / deg) @ w_mp == (adj @ (feat @ w_mp)) / deg.
    # For large N this reduce can ride the adj matmul via an appended ones
    # column; at N=8 the XLU row-sum is negligible.
    deg = jnp.sum(adj, axis=-1, keepdims=True)                     # [Gb, N, 1]

    # Exact reciprocal keeps results bit-close to the torch reference;
    # approx=True (EUP vrcp) is ~free but misses 1e-4 for small integer degrees.
    out = (nbr * pl.reciprocal(deg, approx=False)
           + y_old.reshape(gb, n, f) + bias_ref[...])
    out_ref[...] = out.astype(out_ref.dtype)


def _sage_batched(adjs, feats, w_mp, w_old, bias2d, graphs_per_block):
    """adjs [G,N,N], feats [G,N,F], w_mp/w_old [F,F], bias2d [1,F] -> [G,N,F]."""
    G, N, F = feats.shape
    gb = graphs_per_block
    assert G % gb == 0, "caller pads G to a multiple of graphs_per_block"
    grid = (G // gb,)

    # Advisory cost hint for XLA's scheduler around the custom call.
    flops = G * (2 * 2 * N * F * F + 2 * N * N * F)
    bytes_accessed = (adjs.size * adjs.dtype.itemsize
                      + feats.size * feats.dtype.itemsize
                      + G * N * F * feats.dtype.itemsize          # output
                      + 2 * F * F * w_mp.dtype.itemsize
                      + F * bias2d.dtype.itemsize)

    return pl.pallas_call(
        _sage_kernel,
        out_shape=jax.ShapeDtypeStruct((G, N, F), feats.dtype),
        grid=grid,
        in_specs=[
            # Gb graphs per block: one dense DMA per block for adj and feats.
            pl.BlockSpec((gb, N, N), lambda g: (g, 0, 0)),
            pl.BlockSpec((gb, N, F), lambda g: (g, 0, 0)),
            # Same block index every step -> weights / bias stay VMEM-resident.
            pl.BlockSpec((F, F), lambda g: (0, 0)),
            pl.BlockSpec((F, F), lambda g: (0, 0)),
            pl.BlockSpec((1, F), lambda g: (0, 0)),
        ],
        out_specs=pl.BlockSpec((gb, N, F), lambda g: (g, 0, 0)),
        compiler_params=pltpu.CompilerParams(
            # Graph blocks are independent -> shard across v7x's two TCs.
            # (Set vmem_limit_bytes here once blocks grow beyond the default
            # scoped limit: 16 MiB on v5e, 32 MiB on v6e/v7x.)
            dimension_semantics=("parallel",),
        ),
        cost_estimate=pl.CostEstimate(flops=flops, transcendentals=0,
                                      bytes_accessed=bytes_accessed),
    )(adjs, feats, w_mp, w_old, bias2d)


def _ceil_div(a, b):
    return -(-a // b)


def _graphs_per_block(num_graphs, n, f, feat_bytes, adj_bytes):
    """Gb so that M = Gb*N >= 128 matmul rows, block footprint ~<= 2 MiB, and
    (when possible) at least 2 grid blocks for v7x's two TensorCores."""
    per_graph = n * f * feat_bytes * 2 + n * n * adj_bytes   # feat + out + adj
    by_rows = _ceil_div(128, max(n, 1))
    by_bytes = max(1, (2 << 20) // max(per_graph, 1))
    gb = max(1, min(by_rows, by_bytes, num_graphs))
    if num_graphs >= 2:
        gb = min(gb, _ceil_div(num_graphs, 2))
    return gb


def sage_layer(graphs, weight, bias, *, adj_dtype=jnp.bfloat16, feat_dtype=None):
    """graphs: list of (features [N,F], adj [N,N]); weight: [F, 2F] (torch
    nn.Linear layout); bias: [F].  Returns list of (new_embedding [N,F], adj).

    adj_dtype=bfloat16 is exact for 0/1 GraphSAGE adjacency (halves adjacency
    HBM traffic); pass jnp.float32 for weighted adjacency.  feat_dtype=None
    keeps the caller's feature dtype (f32 matches the torch reference);
    jnp.bfloat16 halves feature traffic at ~4e-3 relative error.
    """
    if not graphs:
        return []

    # Hoisted once (not per graph): split-weight form of cat-then-Linear.
    F = weight.shape[0]
    w_t = weight.T                        # [2F, F]
    w_mp = jnp.asarray(w_t[:F, :])        # acts on the mean-aggregated part
    w_old = jnp.asarray(w_t[F:, :])       # acts on the original features
    bias2d = bias.reshape(1, F)

    # Batch all graphs of identical shape into a single pallas_call.
    # (If this layer is stacked in a multi-layer GNN, keep the graphs
    # pre-batched as [G,N,F]/[G,N,N] device arrays across layers instead of
    # re-stacking/unstacking every call.)
    groups = {}
    for idx, (feat, adj) in enumerate(graphs):
        groups.setdefault((tuple(feat.shape), tuple(adj.shape)), []).append(idx)

    results = [None] * len(graphs)
    for idxs in groups.values():
        feats = jnp.stack([graphs[i][0] for i in idxs], axis=0)        # [G,N,F]
        if feat_dtype is not None:
            feats = feats.astype(feat_dtype)
        adjs = jnp.stack([graphs[i][1] for i in idxs], axis=0).astype(adj_dtype)
        G, N, Fg = feats.shape

        gb = _graphs_per_block(G, N, Fg, feats.dtype.itemsize,
                               adjs.dtype.itemsize)
        g_pad = _ceil_div(G, gb) * gb
        if g_pad > G:
            # Pad with identity-adjacency dummy graphs (deg = 1 -> finite);
            # padded results are sliced off below.
            feats = jnp.concatenate(
                [feats, jnp.zeros((g_pad - G, N, Fg), feats.dtype)], axis=0)
            eye = jnp.broadcast_to(jnp.eye(N, dtype=adjs.dtype),
                                   (g_pad - G, N, N))
            adjs = jnp.concatenate([adjs, eye], axis=0)

        outs = _sage_batched(adjs, feats, w_mp, w_old, bias2d, gb)  # [g_pad,N,F]
        for j, i in enumerate(idxs):
            results[i] = (outs[j], graphs[i][1])
    return results


def _reference(graphs, weight, bias):
    outs = []
    for feat, adj in graphs:
        deg = jnp.sum(adj, axis=1, keepdims=True)
        mp = (adj @ feat) / deg
        concat = jnp.concatenate([mp, feat], axis=1)
        outs.append((concat @ weight.T + bias, adj))
    return outs


if __name__ == "__main__":
    key = jax.random.PRNGKey(0)
    N = 8            # nodes per graph
    F = 32           # input_features
    n_graphs = 32    # enough graphs for M = Gb*N = 128 rows and a 2-block grid

    kw, kb, *gkeys = jax.random.split(key, 2 + 2 * n_graphs)
    # nn.Linear(2F, F): weight [F, 2F], bias [F] — deterministic synthetic init.
    weight = jax.random.normal(kw, (F, 2 * F), dtype=jnp.float32) * 0.1
    bias = jax.random.normal(kb, (F,), dtype=jnp.float32) * 0.1

    graphs = []
    for gi in range(n_graphs):
        kf, ka = gkeys[2 * gi], gkeys[2 * gi + 1]
        feat = jax.random.normal(kf, (N, F), dtype=jnp.float32)
        # Binary adjacency with self-loops so every row degree >= 1.
        adj = (jax.random.uniform(ka, (N, N)) < 0.4).astype(jnp.float32)
        adj = jnp.maximum(adj, jnp.eye(N, dtype=jnp.float32))
        graphs.append((feat, adj))

    outs = sage_layer(graphs, weight, bias)
    for emb, _adj in outs:
        jax.block_until_ready(emb)

    refs = _reference(graphs, weight, bias)
    for (emb, _), (ref, _) in zip(outs, refs):
        assert jnp.allclose(emb, ref, atol=1e-4, rtol=1e-4), "mismatch vs reference"

    print("KERNEL_OK")
</pallas_src>

<mosaic_0001>
module attributes {stable_mosaic.version = 11 : i64} {
  func.func @_sage_kernel(%arg0: i32, %arg1: memref<16x8x8xbf16, #tpu.memory_space<vmem>>, %arg2: memref<16x8x32xf32, #tpu.memory_space<vmem>>, %arg3: memref<32x32xf32, #tpu.memory_space<vmem>>, %arg4: memref<32x32xf32, #tpu.memory_space<vmem>>, %arg5: memref<1x32xf32, #tpu.memory_space<vmem>>, %arg6: memref<16x8x32xf32, #tpu.memory_space<vmem>>) attributes {dimension_semantics = [#tpu.dimension_semantics<parallel>], iteration_bounds = array<i64: 2>, scalar_prefetch = 0 : i64, scratch_operands = 0 : i64, tpu.core_type = #tpu.core_type<tc>, window_params = [{transform_indices = @transform_0, window_bounds = array<i64: 16, 8, 8>}, {transform_indices = @transform_1, window_bounds = array<i64: 16, 8, 32>}, {pipeline_mode = #tpu.pipeline_mode<synchronous>, transform_indices = @transform_2, window_bounds = array<i64: 32, 32>}, {pipeline_mode = #tpu.pipeline_mode<synchronous>, transform_indices = @transform_3, window_bounds = array<i64: 32, 32>}, {pipeline_mode = #tpu.pipeline_mode<synchronous>, transform_indices = @transform_4, window_bounds = array<i64: 1, 32>}, {transform_indices = @transform_5, window_bounds = array<i64: 16, 8, 32>}]} {
    %c0 = arith.constant 0 : index
    %c0_0 = arith.constant 0 : index
    %c0_1 = arith.constant 0 : index
    %0 = vector.load %arg2[%c0, %c0_0, %c0_1] : memref<16x8x32xf32, #tpu.memory_space<vmem>>, vector<16x8x32xf32>
    %1 = vector.shape_cast %0 : vector<16x8x32xf32> to vector<128x32xf32>
    %c0_2 = arith.constant 0 : index
    %c0_3 = arith.constant 0 : index
    %c0_4 = arith.constant 0 : index
    %2 = vector.load %arg1[%c0_2, %c0_3, %c0_4] : memref<16x8x8xbf16, #tpu.memory_space<vmem>>, vector<16x8x8xbf16>
    %3 = arith.extf %2 : vector<16x8x8xbf16> to vector<16x8x8xf32>
    %c0_5 = arith.constant 0 : index
    %c0_6 = arith.constant 0 : index
    %4 = vector.load %arg3[%c0_5, %c0_6] : memref<32x32xf32, #tpu.memory_space<vmem>>, vector<32x32xf32>
    %cst = arith.constant dense<0.000000e+00> : vector<128x32xf32>
    %5 = tpu.matmul %1, %4, %cst {dimension_numbers = #tpu.dot_dimension_numbers<[1], [0], [0], [1], [0, 0, 1, 1], [], []>} : vector<128x32xf32>, vector<32x32xf32>, vector<128x32xf32> -> vector<128x32xf32>
    %c0_7 = arith.constant 0 : index
    %c0_8 = arith.constant 0 : index
    %6 = vector.load %arg4[%c0_7, %c0_8] : memref<32x32xf32, #tpu.memory_space<vmem>>, vector<32x32xf32>
    %cst_9 = arith.constant dense<0.000000e+00> : vector<128x32xf32>
    %7 = tpu.matmul %1, %6, %cst_9 {dimension_numbers = #tpu.dot_dimension_numbers<[1], [0], [0], [1], [0, 0, 1, 1], [], []>} : vector<128x32xf32>, vector<32x32xf32>, vector<128x32xf32> -> vector<128x32xf32>
    %8 = vector.shape_cast %5 : vector<128x32xf32> to vector<16x8x32xf32>
    "tpu.trace_start"() <{level = 10 : i32, message = "gij,gjf->gif"}> : () -> ()
    %cst_10 = arith.constant dense<0.000000e+00> : vector<16x8x32xf32>
    %9 = tpu.matmul %3, %8, %cst_10 {dimension_numbers = #tpu.dot_dimension_numbers<[2], [1], [1], [2], [0, 0, 0, 1, 1, 2], [0], [0]>} : vector<16x8x8xf32>, vector<16x8x32xf32>, vector<16x8x32xf32> -> vector<16x8x32xf32>
    "tpu.trace_stop"() : () -> ()
    %cst_11 = arith.constant dense<0.000000e+00> : vector<16x8xf32>
    %10 = vector.multi_reduction <add>, %3, %cst_11 [2] : vector<16x8x8xf32> to vector<16x8xf32>
    %11 = vector.shape_cast %10 : vector<16x8xf32> to vector<16x8x1xf32>
    %12 = tpu.reciprocal %11 : vector<16x8x1xf32> -> vector<16x8x1xf32>
    %13 = vector.broadcast %12 : vector<16x8x1xf32> to vector<16x8x32xf32>
    %14 = arith.mulf %9, %13 : vector<16x8x32xf32>
    %15 = vector.shape_cast %7 : vector<128x32xf32> to vector<16x8x32xf32>
    %16 = arith.addf %14, %15 : vector<16x8x32xf32>
    %c0_12 = arith.constant 0 : index
    %c0_13 = arith.constant 0 : index
    %17 = vector.load %arg5[%c0_12, %c0_13] : memref<1x32xf32, #tpu.memory_space<vmem>>, vector<1x32xf32>
    %18 = vector.shape_cast %17 : vector<1x32xf32> to vector<1x1x32xf32>
    %19 = vector.broadcast %18 : vector<1x1x32xf32> to vector<16x8x32xf32>
    %20 = arith.addf %16, %19 : vector<16x8x32xf32>
    %c0_14 = arith.constant 0 : index
    %c0_15 = arith.constant 0 : index
    %c0_16 = arith.constant 0 : index
    %21 = vector.load %arg6[%c0_14, %c0_15, %c0_16] : memref<16x8x32xf32, #tpu.memory_space<vmem>>, vector<16x8x32xf32>
    tpu.vector_store %arg6[%c0_14, %c0_15, %c0_16], %20 {strides = array<i32>} : memref<16x8x32xf32, #tpu.memory_space<vmem>>, vector<16x8x32xf32>,
    return
  }
  func.func @transform_0(%arg0: i32) -> (i32, i32, i32) {
    %c0_i32 = arith.constant 0 : i32
    %c0_i32_0 = arith.constant 0 : i32
    %c0_i32_1 = arith.constant 0 : i32
    return %arg0, %c0_i32, %c0_i32_0 : i32, i32, i32
  }
  func.func @transform_1(%arg0: i32) -> (i32, i32, i32) {
    %c0_i32 = arith.constant 0 : i32
    %c0_i32_0 = arith.constant 0 : i32
    %c0_i32_1 = arith.constant 0 : i32
    return %arg0, %c0_i32, %c0_i32_0 : i32, i32, i32
  }
  func.func @transform_2(%arg0: i32) -> (i32, i32) {
    %c0_i32 = arith.constant 0 : i32
    %c0_i32_0 = arith.constant 0 : i32
    %c0_i32_1 = arith.constant 0 : i32
    return %c0_i32, %c0_i32_0 : i32, i32
  }
  func.func @transform_3(%arg0: i32) -> (i32, i32) {
    %c0_i32 = arith.constant 0 : i32
    %c0_i32_0 = arith.constant 0 : i32
    %c0_i32_1 = arith.constant 0 : i32
    return %c0_i32, %c0_i32_0 : i32, i32
  }
  func.func @transform_4(%arg0: i32) -> (i32, i32) {
    %c0_i32 = arith.constant 0 : i32
    %c0_i32_0 = arith.constant 0 : i32
    %c0_i32_1 = arith.constant 0 : i32
    return %c0_i32, %c0_i32_0 : i32, i32
  }
  func.func @transform_5(%arg0: i32) -> (i32, i32, i32) {
    %c0_i32 = arith.constant 0 : i32
    %c0_i32_0 = arith.constant 0 : i32
    %c0_i32_1 = arith.constant 0 : i32
    return %arg0, %c0_i32, %c0_i32_0 : i32, i32, i32
  }
}

</mosaic_0001>

<llo_original>
// kernel: tpu_custom_call.1
$region0: #{tpu_custom_call.1}
  #allocation0 [shape = 'u32[]', space=smem, size = 0x4, offset = 0x4, fixed_abs, tag = 'smem constant byte address 0x4 - core index']
  #allocation1 [shape = 'u32[144,128]{1,0:T(1,128)}', space=vmem, size = 0x12000, scoped, tag = 'internal scratch']
  %s0 = inlined_call_operand.vmem [shape: bf16[32,8,8], index: 0, kind: input, shape index: {}]
  %s1 = inlined_call_operand.hbm [shape: f32[32,8,32], index: 1, kind: input, shape index: {}]
  %s2 = inlined_call_operand.vmem [shape: f32[32,32], index: 2, kind: input, shape index: {}]
  %s3 = inlined_call_operand.vmem [shape: f32[32,32], index: 3, kind: input, shape index: {}]
  %s4 = inlined_call_operand.vmem [shape: f32[1,32], index: 4, kind: input, shape index: {}]
  %s5 = inlined_call_operand.hbm [shape: f32[32,8,32], index: 5, kind: output, shape index: {}]
  %s6 = sld [smem:[#allocation0]]
  $region57: #{tpu_custom_call.1} parent=0
    _
  %s8 = ssub.s32 1, %s6
  %s9 = scalar_select 0, %s8, %s6
  $region1: #{tpu_custom_call.1} parent=0
    #allocation2 [shape = 'u8[131072]{0}', space=vmem, size = 0x20000, scoped, tag = 'input window, operand 1']
    #allocation3 [shape = 's32[2]{0}', space=sflag, size = 0x8, scoped, tag = 'scoped memory for tpu_custom_call.1']
    #allocation4 [shape = 's32[2]{0}', space=sflag, size = 0x8, scoped, tag = 'scoped memory for tpu_custom_call.1']
    #allocation5 [shape = 'u8[131072]{0}', space=vmem, size = 0x20000, scoped, tag = 'output window, operand 0']
    %10 = vsyncpa [#allocation3], 0
    %s11 = scalar_lea.sflag [#allocation3], 1
    %12 = vsyncpa %s11, 0
    %13 = vsyncpa [#allocation4], 0
    %s14 = scalar_lea.sflag [#allocation4], 1
    %15 = vsyncpa %s14, 0
    loop: start=0, step=1, limit=4
    $region2: #{tpu_custom_call.1} parent=1 // loop_pre_header
      _
    $region3: #{tpu_custom_call.1} parent=1 // loop_header
      %s17 = sphi 0, %s21
      %p18 = scmp.ge.s32.totalorder %s17, 4
      %s27 = sphi 0, %s29
      %s30 = sphi 0, %s27
      %s31 = sphi 0, %s30
      %s47 = sphi 0, %s31
      %s53 = sphi 0, %s55
      %s56 = sphi 0, %s53
      %s57 = sphi 0, %s56
      %s73 = sphi 0, %s57
      %s77 = sphi 0, %s77
      %s79 = sphi 0, %s77
      %s80 = sphi 0, %s79
      %s94 = sphi 0, %s80
      %s98 = sphi 0, %s98
      %s100 = sphi 0, %s98
      %s101 = sphi 0, %s100
      %s115 = sphi 0, %s101
      %s119 = sphi 0, %s119
      %s121 = sphi 0, %s119
      %s122 = sphi 0, %s121
      %s136 = sphi 0, %s122
      %s142 = sphi 0, %s144
      %s145 = sphi 0, %s142
      %s146 = sphi 0, %s145
      %s162 = sphi 0, %s146
    $region4: #{tpu_custom_call.1} parent=1 // loop_header_branch
      %20 = sbr.rel (%p18) target = $region8
    $region5: #{tpu_custom_call.1} parent=1 // loop_body
      %s22 = ssub.s32 %s17, 1
      %s23 = ssub.s32 %s17, 2
      %s24 = sadd.s32 %s17, 1
      %s25 = ssub.s32 %s17, %s24
      %p26 = scmp.eq.s32.totalorder %s25, 0
      %s28 = sadd.s32 %s27, 1
      %s29 = scalar_select %p26, %s27, %s28
      %p32 = pneg %p26
      %p33 = scmp.eq.s32.totalorder %s17, 1
      %p34 = por %p32, %p33
      %p35 = scmp.ne.s32.totalorder %s27, %s30
      %p36 = scmp.eq.s32.totalorder %s17, 0
      %p37 = por %p35, %p36
      %p38 = scmp.ne.s32.totalorder %s27, %s30
      %p39 = scmp.eq.s32.totalorder %s22, 1
      %p40 = por %p38, %p39
      %p41 = scmp.ne.s32.totalorder %s30, %s31
      %p42 = scmp.eq.s32.totalorder %s22, 0
      %p43 = por %p41, %p42
      %p44 = scmp.ne.s32.totalorder %s30, %s31
      %p45 = scmp.eq.s32.totalorder %s23, 1
      %p46 = por %p44, %p45
      %p48 = scmp.ne.s32.totalorder %s31, %s47
      %p49 = scmp.eq.s32.totalorder %s23, 0
      %p50 = por %p48, %p49
      %s51 = ssub.s32 %s17, %s24
      %p52 = scmp.eq.s32.totalorder %s51, 0
      %s54 = sadd.s32 %s53, 1
      %s55 = scalar_select %p52, %s53, %s54
      %p58 = pneg %p52
      %p59 = scmp.eq.s32.totalorder %s17, 1
      %p60 = por %p58, %p59
      %p61 = scmp.ne.s32.totalorder %s53, %s56
      %p62 = scmp.eq.s32.totalorder %s17, 0
      %p63 = por %p61, %p62
      %p64 = scmp.ne.s32.totalorder %s53, %s56
      %p65 = scmp.eq.s32.totalorder %s22, 1
      %p66 = por %p64, %p65
      %p67 = scmp.ne.s32.totalorder %s56, %s57
      %p68 = scmp.eq.s32.totalorder %s22, 0
      %p69 = por %p67, %p68
      %p70 = scmp.ne.s32.totalorder %s56, %s57
      %p71 = scmp.eq.s32.totalorder %s23, 1
      %p72 = por %p70, %p71
      %p74 = scmp.ne.s32.totalorder %s57, %s73
      %p75 = scmp.eq.s32.totalorder %s23, 0
      %p76 = por %p74, %p75
      %s78 = sadd.s32 %s77, 1
      %p81 = scmp.eq.s32.totalorder %s17, 1
      %p82 = scmp.ne.s32.totalorder %s77, %s79
      %p83 = scmp.eq.s32.totalorder %s17, 0
      %p84 = por %p82, %p83
      %p85 = scmp.ne.s32.totalorder %s77, %s79
      %p86 = scmp.eq.s32.totalorder %s22, 1
      %p87 = por %p85, %p86
      %p88 = scmp.ne.s32.totalorder %s79, %s80
      %p89 = scmp.eq.s32.totalorder %s22, 0
      %p90 = por %p88, %p89
      %p91 = scmp.ne.s32.totalorder %s79, %s80
      %p92 = scmp.eq.s32.totalorder %s23, 1
      %p93 = por %p91, %p92
      %p95 = scmp.ne.s32.totalorder %s80, %s94
      %p96 = scmp.eq.s32.totalorder %s23, 0
      %p97 = por %p95, %p96
      %s99 = sadd.s32 %s98, 1
      %p102 = scmp.eq.s32.totalorder %s17, 1
      %p103 = scmp.ne.s32.totalorder %s98, %s100
      %p104 = scmp.eq.s32.totalorder %s17, 0
      %p105 = por %p103, %p104
      %p106 = scmp.ne.s32.totalorder %s98, %s100
      %p107 = scmp.eq.s32.totalorder %s22, 1
      %p108 = por %p106, %p107
      %p109 = scmp.ne.s32.totalorder %s100, %s101
      %p110 = scmp.eq.s32.totalorder %s22, 0
      %p111 = por %p109, %p110
      %p112 = scmp.ne.s32.totalorder %s100, %s101
      %p113 = scmp.eq.s32.totalorder %s23, 1
      %p114 = por %p112, %p113
      %p116 = scmp.ne.s32.totalorder %s101, %s115
      %p117 = scmp.eq.s32.totalorder %s23, 0
      %p118 = por %p116, %p117
      %s120 = sadd.s32 %s119, 1
      %p123 = scmp.eq.s32.totalorder %s17, 1
      %p124 = scmp.ne.s32.totalorder %s119, %s121
      %p125 = scmp.eq.s32.totalorder %s17, 0
      %p126 = por %p124, %p125
      %p127 = scmp.ne.s32.totalorder %s119, %s121
      %p128 = scmp.eq.s32.totalorder %s22, 1
      %p129 = por %p127, %p128
      %p130 = scmp.ne.s32.totalorder %s121, %s122
      %p131 = scmp.eq.s32.totalorder %s22, 0
      %p132 = por %p130, %p131
      %p133 = scmp.ne.s32.totalorder %s121, %s122
      %p134 = scmp.eq.s32.totalorder %s23, 1
      %p135 = por %p133, %p134
      %p137 = scmp.ne.s32.totalorder %s122, %s136
      %p138 = scmp.eq.s32.totalorder %s23, 0
      %p139 = por %p137, %p138
      %s140 = ssub.s32 %s17, %s24
      %p141 = scmp.eq.s32.totalorder %s140, 0
      %s143 = sadd.s32 %s142, 1
      %s144 = scalar_select %p141, %s142, %s143
      %p147 = pneg %p141
      %p148 = scmp.eq.s32.totalorder %s17, 1
      %p149 = por %p147, %p148
      %p150 = scmp.ne.s32.totalorder %s142, %s145
      %p151 = scmp.eq.s32.totalorder %s17, 0
      %p152 = por %p150, %p151
      %p153 = scmp.ne.s32.totalorder %s142, %s145
      %p154 = scmp.eq.s32.totalorder %s22, 1
      %p155 = por %p153, %p154
      %p156 = scmp.ne.s32.totalorder %s145, %s146
      %p157 = scmp.eq.s32.totalorder %s22, 0
      %p158 = por %p156, %p157
      %p159 = scmp.ne.s32.totalorder %s145, %s146
      %p160 = scmp.eq.s32.totalorder %s23, 1
      %p161 = por %p159, %p160
      %p163 = scmp.ne.s32.totalorder %s146, %s162
      %p164 = scmp.eq.s32.totalorder %s23, 0
      %p165 = por %p163, %p164
      %p166 = scmp.le.s32.totalorder 1, %s17
      %p167 = scmp.lt.s32.totalorder %s17, 3
      %p168 = pnand %p166, %p167
      %p169 = pneg %p168
      // Predicated region
      $region9: #{tpu_custom_call.1} parent=5 // pred_check
        _
      $region10: #{tpu_custom_call.1} parent=5 // pred_check_branch
        %171 = sbr.rel (%p168) target = $region12
      $region11: #{tpu_custom_call.1} parent=5 // pred_region
        %s172 = ssub.s32 %s17, 1
        // Predicated region
        $region13: #{tpu_custom_call.1} parent=11 // pred_check
          %p173 = pneg %p90
        $region14: #{tpu_custom_call.1} parent=11 // pred_check_branch
          %175 = sbr.rel (%p173) target = $region16
        $region15: #{tpu_custom_call.1} parent=11 // pred_region
          _
        $region16: #{tpu_custom_call.1} parent=11 // pred_fallthru
          _
        // Predicated region
        $region17: #{tpu_custom_call.1} parent=11 // pred_check
          %p176 = pneg %p111
        $region18: #{tpu_custom_call.1} parent=11 // pred_check_branch
          %178 = sbr.rel (%p176) target = $region20
        $region19: #{tpu_custom_call.1} parent=11 // pred_region
          _
        $region20: #{tpu_custom_call.1} parent=11 // pred_fallthru
          _
        // Predicated region
        $region21: #{tpu_custom_call.1} parent=11 // pred_check
          %p179 = pneg %p132
        $region22: #{tpu_custom_call.1} parent=11 // pred_check_branch
          %181 = sbr.rel (%p179) target = $region24
        $region23: #{tpu_custom_call.1} parent=11 // pred_region
          _
        $region24: #{tpu_custom_call.1} parent=11 // pred_fallthru
          _
      $region12: #{tpu_custom_call.1} parent=5 // pred_fallthru
        _
      %p182 = scmp.lt.s32.totalorder %s17, 2
      // Predicated region
      $region25: #{tpu_custom_call.1} parent=5 // pred_check
        %p183 = pneg %p182
      $region26: #{tpu_custom_call.1} parent=5 // pred_check_branch
        %185 = sbr.rel (%p183) target = $region28
      $region27: #{tpu_custom_call.1} parent=5 // pred_region
        // Predicated region
        $region29: #{tpu_custom_call.1} parent=27 // pred_check
          %p186 = pneg %p37
        $region30: #{tpu_custom_call.1} parent=27 // pred_check_branch
          %188 = sbr.rel (%p186) target = $region32
        $region31: #{tpu_custom_call.1} parent=27 // pred_region
          %s189 = smul.u32 16, %s17
          %p190 = scmp.lt.s32.totalorder %s189, 31
          %s191 = scalar_select %p190, %s189, 31
          %s192 = smul.addr %s191, 4
          %s193 = scalar_lea.vmem %s0, %s192
          %s194 = smul.u32 16, %s17
        $region32: #{tpu_custom_call.1} parent=27 // pred_fallthru
          _
        // Predicated region
        $region33: #{tpu_custom_call.1} parent=27 // pred_check
          %p195 = pneg %p63
        $region34: #{tpu_custom_call.1} parent=27 // pred_check_branch
          %197 = sbr.rel (%p195) target = $region36
        $region35: #{tpu_custom_call.1} parent=27 // pred_region
          %s198 = sand.u32 %s53, 1
          %s199 = scalar_lea.sflag [#allocation3], %s198
          %s200 = sand.u32 %s53, 1
          %s201 = smul.addr %s200, 128
          %s202 = scalar_lea.vmem [#allocation2], %s201
          %s203 = smul.u32 16, %s17
          %s205 = ssub.s32 2048, 2048
          %206 = vsyncadd %s199, %s205
          %s207 = smul.addr %s203, 128
          %s208 = scalar_lea.hbm %s1, %s207
          %s209 = sshll.u32 %s202, 4
          %s210 = int_to_ptr.vmem [resolvable:$true] %s209
          %215 = dma.hbm_to_vmem [thread:$0]  %s208, 2048, %s210, %s199, 128, 128, 8
        $region36: #{tpu_custom_call.1} parent=27 // pred_fallthru
          _
      $region28: #{tpu_custom_call.1} parent=5 // pred_fallthru
        _
      %p216 = scmp.le.s32.totalorder 1, %s17
      %p217 = scmp.lt.s32.totalorder %s17, 3
      %p218 = pnand %p216, %p217
      %p219 = pneg %p218
      // Predicated region
      $region37: #{tpu_custom_call.1} parent=5 // pred_check
        _
      $region38: #{tpu_custom_call.1} parent=5 // pred_check_branch
        %221 = sbr.rel (%p218) target = $region40
      $region39: #{tpu_custom_call.1} parent=5 // pred_region
        %s222 = ssub.s32 %s17, 1
        %s223 = sand.u32 %s56, 1
        %s224 = scalar_lea.sflag [#allocation3], %s223
        %s225 = sand.u32 %s56, 1
        %s226 = smul.addr %s225, 128
        %s227 = scalar_lea.vmem [#allocation2], %s226
        // Predicated region
        $region41: #{tpu_custom_call.1} parent=39 // pred_check
          %p228 = pneg %p69
        $region42: #{tpu_custom_call.1} parent=39 // pred_check_branch
          %230 = sbr.rel (%p228) target = $region44
        $region43: #{tpu_custom_call.1} parent=39 // pred_region
          %231 = dma.done %s224, 2048
        $region44: #{tpu_custom_call.1} parent=39 // pred_fallthru
          _
        %s232 = smul.u32 16, %s22
        %p233 = scmp.lt.s32.totalorder %s232, 31
        %s234 = scalar_select %p233, %s232, 31
        %s235 = smul.addr %s234, 4
        %s236 = scalar_lea.vmem %s0, %s235
        %p237 = pneg %p43
        %p238 = pneg %p40
        %s239 = sand.u32 %s56, 1
        %s240 = scalar_lea.sflag [#allocation3], %s239
        %s241 = sand.u32 %s56, 1
        %s242 = smul.addr %s241, 128
        %s243 = scalar_lea.vmem [#allocation2], %s242
        %p244 = pneg %p69
        %p245 = pneg %p66
        %p246 = pneg %p90
        %p247 = pneg %p87
        %p248 = pneg %p111
        %p249 = pneg %p108
        %p250 = pneg %p132
        %p251 = pneg %p129
        %p252 = pneg %p158
        %p253 = pneg %p155
        %s254 = sand.u32 %s145, 1
        %s255 = scalar_lea.sflag [#allocation4], %s254
        %s256 = sand.u32 %s145, 1
        %s257 = smul.addr %s256, 128
        %s258 = scalar_lea.vmem [#allocation5], %s257
        %s259 = smul.u32 16, %s22
        %p260 = scmp.lt.s32.totalorder %s259, 31
        %s261 = scalar_select %p260, %s259, 31
        %s262 = smul.addr %s261, 4
        %s263 = scalar_lea.vmem %s0, %s262
        %s264 = smul.u32 16, %s22
        %s265 = smul.u32 16, %s22
        %s266 = smul.u32 16, %s22
        %v267 = vld [vmem:[%s227] sm:$0xff]
        %v268 = vld [vmem:[%s227 + $0x8] sm:$0xff]
        %v269 = vld [vmem:[%s227 + $0x10] sm:$0xff]
        %v270 = vld [vmem:[%s227 + $0x18] sm:$0xff]
        %v271 = vld [vmem:[%s227 + $0x20] sm:$0xff]
        %v272 = vld [vmem:[%s227 + $0x28] sm:$0xff]
        %v273 = vld [vmem:[%s227 + $0x30] sm:$0xff]
        %v274 = vld [vmem:[%s227 + $0x38] sm:$0xff]
        %v275 = vld [vmem:[%s227 + $0x40] sm:$0xff]
        %v276 = vld [vmem:[%s227 + $0x48] sm:$0xff]
        %v277 = vld [vmem:[%s227 + $0x50] sm:$0xff]
        %v278 = vld [vmem:[%s227 + $0x58] sm:$0xff]
        %v279 = vld [vmem:[%s227 + $0x60] sm:$0xff]
        %v280 = vld [vmem:[%s227 + $0x68] sm:$0xff]
        %v281 = vld [vmem:[%s227 + $0x70] sm:$0xff]
        %v282 = vld [vmem:[%s227 + $0x78] sm:$0xff]
        %v283 = vld [vmem:[%s263] sm:$0xf]
        %v284 = vld [vmem:[%s263 + $0x4] sm:$0xf]
        %v285 = vld [vmem:[%s263 + $0x8] sm:$0xf]
        %v286 = vld [vmem:[%s263 + $0xc] sm:$0xf]
        %v287 = vld [vmem:[%s263 + $0x10] sm:$0xf]
        %v288 = vld [vmem:[%s263 + $0x14] sm:$0xf]
        %v289 = vld [vmem:[%s263 + $0x18] sm:$0xf]
        %v290 = vld [vmem:[%s263 + $0x1c] sm:$0xf]
        %v291 = vld [vmem:[%s263 + $0x20] sm:$0xf]
        %v292 = vld [vmem:[%s263 + $0x24] sm:$0xf]
        %v293 = vld [vmem:[%s263 + $0x28] sm:$0xf]
        %v294 = vld [vmem:[%s263 + $0x2c] sm:$0xf]
        %v295 = vld [vmem:[%s263 + $0x30] sm:$0xf]
        %v296 = vld [vmem:[%s263 + $0x34] sm:$0xf]
        %v297 = vld [vmem:[%s263 + $0x38] sm:$0xf]
        %v298 = vld [vmem:[%s263 + $0x3c] sm:$0xf]
        %v299 = vunpack.c.l.bf16 %v283
        %v300 = vunpack.c.l.bf16 %v284
        %v301 = vunpack.c.l.bf16 %v285
        %v302 = vunpack.c.l.bf16 %v286
        %v303 = vunpack.c.l.bf16 %v287
        %v304 = vunpack.c.l.bf16 %v288
        %v305 = vunpack.c.l.bf16 %v289
        %v306 = vunpack.c.l.bf16 %v290
        %v307 = vunpack.c.l.bf16 %v291
        %v308 = vunpack.c.l.bf16 %v292
        %v309 = vunpack.c.l.bf16 %v293
        %v310 = vunpack.c.l.bf16 %v294
        %v311 = vunpack.c.l.bf16 %v295
        %v312 = vunpack.c.l.bf16 %v296
        %v313 = vunpack.c.l.bf16 %v297
        %v314 = vunpack.c.l.bf16 %v298
        %v315 = vld [vmem:[%s2] sm:$0xff]
        %v316 = vld [vmem:[%s2 + $0x8] sm:$0xff]
        %v317 = vld [vmem:[%s2 + $0x10] sm:$0xff]
        %v318 = vld [vmem:[%s2 + $0x18] sm:$0xff]
        %vm319 = vcmask 261120
        %v321 = vsel %vm319, %v267, 0
        %v324 = vsel %vm319, %v268, 0
        %v327 = vsel %vm319, %v269, 0
        %v330 = vsel %vm319, %v270, 0
        %v333 = vsel %vm319, %v271, 0
        %v336 = vsel %vm319, %v272, 0
        %v339 = vsel %vm319, %v273, 0
        %v342 = vsel %vm319, %v274, 0
        %v345 = vsel %vm319, %v275, 0
        %v348 = vsel %vm319, %v276, 0
        %v351 = vsel %vm319, %v277, 0
        %v354 = vsel %vm319, %v278, 0
        %v357 = vsel %vm319, %v279, 0
        %v360 = vsel %vm319, %v280, 0
        %v363 = vsel %vm319, %v281, 0
        %v366 = vsel %vm319, %v282, 0
        %368 = vmatprep.subr.mxu0 0.0
        %369 = vmatpush1.msra.mxu0 %v315
        %370 = vmatprep.subr.mxu0 0.0
        %371 = vmatpush1.msra.mxu0 %v316
        %372 = vmatprep.subr.mxu0 0.0
        %373 = vmatpush1.msra.mxu0 %v317
        %374 = vmatprep.subr.mxu0 0.0
        %375 = vmatpush1.msra.mxu0 %v318
        %376 = vmatprep.subr.mxu0 0.0
        %377 = vmatpush1.msra.mxu0 0.0
        %378 = vmatprep.subr.mxu0 0.0
        %379 = vmatpush1.msra.mxu0 0.0
        %380 = vmatprep.subr.mxu0 0.0
        %381 = vmatpush1.msra.mxu0 0.0
        %382 = vmatprep.subr.mxu0 0.0
        %383 = vmatpush1.msra.mxu0 0.0
        %384 = vmatprep.subr.mxu0 0.0
        %385 = vmatpush1.msra.mxu0 0.0
        %386 = vmatprep.subr.mxu0 0.0
        %387 = vmatpush1.msra.mxu0 0.0
        %388 = vmatprep.subr.mxu0 0.0
        %389 = vmatpush1.msra.mxu0 0.0
        %390 = vmatprep.subr.mxu0 0.0
        %391 = vmatpush1.msra.mxu0 0.0
        %392 = vmatprep.subr.mxu0 0.0
        %393 = vmatpush1.msra.mxu0 0.0
        %394 = vmatprep.subr.mxu0 0.0
        %395 = vmatpush1.msra.mxu0 0.0
        %396 = vmatprep.subr.mxu0 0.0
        %397 = vmatpush1.msra.mxu0 0.0
        %398 = vmatprep.subr.mxu0 0.0
        %399 = vmatpush1.msra.mxu0 0.0
        %400 = vmatprep.subr.mxu0 0.0
        %401 = vmatpush1.msra.mxu0 0.0
        %402 = vmatprep.subr.mxu0 0.0
        %403 = vmatpush1.msra.mxu0 0.0
        %404 = vmatprep.subr.mxu0 0.0
        %405 = vmatpush1.msra.mxu0 0.0
        %406 = vmatprep.subr.mxu0 0.0
        %407 = vmatpush1.msra.mxu0 0.0
        %408 = vmatprep.subr.mxu0 0.0
        %409 = vmatpush1.msra.mxu0 0.0
        %410 = vmatprep.subr.mxu0 0.0
        %411 = vmatpush1.msra.mxu0 0.0
        %412 = vmatprep.subr.mxu0 0.0
        %413 = vmatpush1.msra.mxu0 0.0
        %414 = vmatprep.subr.mxu0 0.0
        %415 = vmatpush1.msra.mxu0 0.0
        %416 = vmatprep.subr.mxu0 0.0
        %417 = vmatpush1.msra.mxu0 0.0
        %418 = vmatprep.subr.mxu0 0.0
        %419 = vmatpush1.msra.mxu0 0.0
        %420 = vmatprep.subr.mxu0 0.0
        %421 = vmatpush1.msra.mxu0 0.0
        %422 = vmatprep.subr.mxu0 0.0
        %423 = vmatpush1.msra.mxu0 0.0
        %424 = vmatprep.subr.mxu0 0.0
        %425 = vmatpush1.msra.mxu0 0.0
        %426 = vmatprep.subr.mxu0 0.0
        %427 = vmatpush1.msra.mxu0 0.0
        %428 = vmatprep.subr.mxu0 0.0
        %429 = vmatpush1.msra.mxu0 0.0
        %430 = vmatprep.subr.mxu0 0.0
        %431 = vmatpush1.msra.mxu0 0.0
        %432 = vmatprep.mubr.f32.mxu0 0.0
        %433 = vmatmul.mubr.f32.gmra.mrb[0].mxu0 %v321
        %v434 = vpop.f32.mrb[0].mxu0
        %v435 = vadd.f32 0.0, %v434
        %v436 = vpop.f32.mrb[0].mxu0
        %437 = vmatprep.mubr.f32.mxu0 0.0
        %438 = vmatmul.mubr.f32.gmra.mrb[0].mxu0 %v324
        %v439 = vpop.f32.mrb[0].mxu0
        %v440 = vadd.f32 0.0, %v439
        %v441 = vpop.f32.mrb[0].mxu0
        %442 = vmatprep.mubr.f32.mxu0 0.0
        %443 = vmatmul.mubr.f32.gmra.mrb[0].mxu0 %v327
        %v444 = vpop.f32.mrb[0].mxu0
        %v445 = vadd.f32 0.0, %v444
        %v446 = vpop.f32.mrb[0].mxu0
        %447 = vmatprep.mubr.f32.mxu0 0.0
        %448 = vmatmul.mubr.f32.gmra.mrb[0].mxu0 %v330
        %v449 = vpop.f32.mrb[0].mxu0
        %v450 = vadd.f32 0.0, %v449
        %v451 = vpop.f32.mrb[0].mxu0
        %452 = vmatprep.mubr.f32.mxu0 0.0
        %453 = vmatmul.mubr.f32.gmra.mrb[0].mxu0 %v333
        %v454 = vpop.f32.mrb[0].mxu0
        %v455 = vadd.f32 0.0, %v454
        %v456 = vpop.f32.mrb[0].mxu0
        %457 = vmatprep.mubr.f32.mxu0 0.0
        %458 = vmatmul.mubr.f32.gmra.mrb[0].mxu0 %v336
        %v459 = vpop.f32.mrb[0].mxu0
        %v460 = vadd.f32 0.0, %v459
        %v461 = vpop.f32.mrb[0].mxu0
        %462 = vmatprep.mubr.f32.mxu0 0.0
        %463 = vmatmul.mubr.f32.gmra.mrb[0].mxu0 %v339
        %v464 = vpop.f32.mrb[0].mxu0
        %v465 = vadd.f32 0.0, %v464
        %v466 = vpop.f32.mrb[0].mxu0
        %467 = vmatprep.mubr.f32.mxu0 0.0
        %468 = vmatmul.mubr.f32.gmra.mrb[0].mxu0 %v342
        %v469 = vpop.f32.mrb[0].mxu0
        %v470 = vadd.f32 0.0, %v469
        %v471 = vpop.f32.mrb[0].mxu0
        %472 = vmatprep.mubr.f32.mxu0 0.0
        %473 = vmatmul.mubr.f32.gmra.mrb[0].mxu0 %v345
        %v474 = vpop.f32.mrb[0].mxu0
        %v475 = vadd.f32 0.0, %v474
        %v476 = vpop.f32.mrb[0].mxu0
        %477 = vmatprep.mubr.f32.mxu0 0.0
        %478 = vmatmul.mubr.f32.gmra.mrb[0].mxu0 %v348
        %v479 = vpop.f32.mrb[0].mxu0
        %v480 = vadd.f32 0.0, %v479
        %v481 = vpop.f32.mrb[0].mxu0
        %482 = vmatprep.mubr.f32.mxu0 0.0
        %483 = vmatmul.mubr.f32.gmra.mrb[0].mxu0 %v351
        %v484 = vpop.f32.mrb[0].mxu0
        %v485 = vadd.f32 0.0, %v484
        %v486 = vpop.f32.mrb[0].mxu0
        %487 = vmatprep.mubr.f32.mxu0 0.0
        %488 = vmatmul.mubr.f32.gmra.mrb[0].mxu0 %v354
        %v489 = vpop.f32.mrb[0].mxu0
        %v490 = vadd.f32 0.0, %v489
        %v491 = vpop.f32.mrb[0].mxu0
        %492 = vmatprep.mubr.f32.mxu0 0.0
        %493 = vmatmul.mubr.f32.gmra.mrb[0].mxu0 %v357
        %v494 = vpop.f32.mrb[0].mxu0
        %v495 = vadd.f32 0.0, %v494
        %v496 = vpop.f32.mrb[0].mxu0
        %497 = vmatprep.mubr.f32.mxu0 0.0
        %498 = vmatmul.mubr.f32.gmra.mrb[0].mxu0 %v360
        %v499 = vpop.f32.mrb[0].mxu0
        %v500 = vadd.f32 0.0, %v499
        %v501 = vpop.f32.mrb[0].mxu0
        %502 = vmatprep.mubr.f32.mxu0 0.0
        %503 = vmatmul.mubr.f32.gmra.mrb[0].mxu0 %v363
        %v504 = vpop.f32.mrb[0].mxu0
        %v505 = vadd.f32 0.0, %v504
        %v506 = vpop.f32.mrb[0].mxu0
        %507 = vmatprep.mubr.f32.mxu0 0.0
        %508 = vmatmul.mubr.f32.gmra.mrb[0].mxu0 %v366
        %v509 = vpop.f32.mrb[0].mxu0
        %v510 = vadd.f32 0.0, %v509
        %v511 = vpop.f32.mrb[0].mxu0
        %512 = vdwg.mxu0
        %v513 = vld [vmem:[%s3] sm:$0xff]
        %v514 = vld [vmem:[%s3 + $0x8] sm:$0xff]
        %v515 = vld [vmem:[%s3 + $0x10] sm:$0xff]
        %v516 = vld [vmem:[%s3 + $0x18] sm:$0xff]
        %517 = vmatprep.subr.mxu0 0.0
        %518 = vmatpush1.msra.mxu0 %v513
        %519 = vmatprep.subr.mxu0 0.0
        %520 = vmatpush1.msra.mxu0 %v514
        %521 = vmatprep.subr.mxu0 0.0
        %522 = vmatpush1.msra.mxu0 %v515
        %523 = vmatprep.subr.mxu0 0.0
        %524 = vmatpush1.msra.mxu0 %v516
        %525 = vmatprep.subr.mxu0 0.0
        %526 = vmatpush1.msra.mxu0 0.0
        %527 = vmatprep.subr.mxu0 0.0
        %528 = vmatpush1.msra.mxu0 0.0
        %529 = vmatprep.subr.mxu0 0.0
        %530 = vmatpush1.msra.mxu0 0.0
        %531 = vmatprep.subr.mxu0 0.0
        %532 = vmatpush1.msra.mxu0 0.0
        %533 = vmatprep.subr.mxu0 0.0
        %534 = vmatpush1.msra.mxu0 0.0
        %535 = vmatprep.subr.mxu0 0.0
        %536 = vmatpush1.msra.mxu0 0.0
        %537 = vmatprep.subr.mxu0 0.0
        %538 = vmatpush1.msra.mxu0 0.0
        %539 = vmatprep.subr.mxu0 0.0
        %540 = vmatpush1.msra.mxu0 0.0
        %541 = vmatprep.subr.mxu0 0.0
        %542 = vmatpush1.msra.mxu0 0.0
        %543 = vmatprep.subr.mxu0 0.0
        %544 = vmatpush1.msra.mxu0 0.0
        %545 = vmatprep.subr.mxu0 0.0
        %546 = vmatpush1.msra.mxu0 0.0
        %547 = vmatprep.subr.mxu0 0.0
        %548 = vmatpush1.msra.mxu0 0.0
        %549 = vmatprep.subr.mxu0 0.0
        %550 = vmatpush1.msra.mxu0 0.0
        %551 = vmatprep.subr.mxu0 0.0
        %552 = vmatpush1.msra.mxu0 0.0
        %553 = vmatprep.subr.mxu0 0.0
        %554 = vmatpush1.msra.mxu0 0.0
        %555 = vmatprep.subr.mxu0 0.0
        %556 = vmatpush1.msra.mxu0 0.0
        %557 = vmatprep.subr.mxu0 0.0
        %558 = vmatpush1.msra.mxu0 0.0
        %559 = vmatprep.subr.mxu0 0.0
        %560 = vmatpush1.msra.mxu0 0.0
        %561 = vmatprep.subr.mxu0 0.0
        %562 = vmatpush1.msra.mxu0 0.0
        %563 = vmatprep.subr.mxu0 0.0
        %564 = vmatpush1.msra.mxu0 0.0
        %565 = vmatprep.subr.mxu0 0.0
        %566 = vmatpush1.msra.mxu0 0.0
        %567 = vmatprep.subr.mxu0 0.0
        %568 = vmatpush1.msra.mxu0 0.0
        %569 = vmatprep.subr.mxu0 0.0
        %570 = vmatpush1.msra.mxu0 0.0
        %571 = vmatprep.subr.mxu0 0.0
        %572 = vmatpush1.msra.mxu0 0.0
        %573 = vmatprep.subr.mxu0 0.0
        %574 = vmatpush1.msra.mxu0 0.0
        %575 = vmatprep.subr.mxu0 0.0
        %576 = vmatpush1.msra.mxu0 0.0
        %577 = vmatprep.subr.mxu0 0.0
        %578 = vmatpush1.msra.mxu0 0.0
        %579 = vmatprep.subr.mxu0 0.0
        %580 = vmatpush1.msra.mxu0 0.0
        %581 = vmatprep.mubr.f32.mxu0 0.0
        %582 = vmatmul.mubr.f32.gmra.mrb[0].mxu0 %v321
        %v583 = vpop.f32.mrb[0].mxu0
        %v584 = vadd.f32 0.0, %v583
        %v585 = vpop.f32.mrb[0].mxu0
        %586 = vmatprep.mubr.f32.mxu0 0.0
        %587 = vmatmul.mubr.f32.gmra.mrb[0].mxu0 %v324
        %v588 = vpop.f32.mrb[0].mxu0
        %v589 = vadd.f32 0.0, %v588
        %v590 = vpop.f32.mrb[0].mxu0
        %591 = vmatprep.mubr.f32.mxu0 0.0
        %592 = vmatmul.mubr.f32.gmra.mrb[0].mxu0 %v327
        %v593 = vpop.f32.mrb[0].mxu0
        %v594 = vadd.f32 0.0, %v593
        %v595 = vpop.f32.mrb[0].mxu0
        %596 = vmatprep.mubr.f32.mxu0 0.0
        %597 = vmatmul.mubr.f32.gmra.mrb[0].mxu0 %v330
        %v598 = vpop.f32.mrb[0].mxu0
        %v599 = vadd.f32 0.0, %v598
        %v600 = vpop.f32.mrb[0].mxu0
        %601 = vmatprep.mubr.f32.mxu0 0.0
        %602 = vmatmul.mubr.f32.gmra.mrb[0].mxu0 %v333
        %v603 = vpop.f32.mrb[0].mxu0
        %v604 = vadd.f32 0.0, %v603
        %v605 = vpop.f32.mrb[0].mxu0
        %606 = vmatprep.mubr.f32.mxu0 0.0
        %607 = vmatmul.mubr.f32.gmra.mrb[0].mxu0 %v336
        %v608 = vpop.f32.mrb[0].mxu0
        %v609 = vadd.f32 0.0, %v608
        %v610 = vpop.f32.mrb[0].mxu0
        %611 = vmatprep.mubr.f32.mxu0 0.0
        %612 = vmatmul.mubr.f32.gmra.mrb[0].mxu0 %v339
        %v613 = vpop.f32.mrb[0].mxu0
        %v614 = vadd.f32 0.0, %v613
        %v615 = vpop.f32.mrb[0].mxu0
        %616 = vmatprep.mubr.f32.mxu0 0.0
        %617 = vmatmul.mubr.f32.gmra.mrb[0].mxu0 %v342
        %v618 = vpop.f32.mrb[0].mxu0
        %v619 = vadd.f32 0.0, %v618
        %v620 = vpop.f32.mrb[0].mxu0
        %621 = vmatprep.mubr.f32.mxu0 0.0
        %622 = vmatmul.mubr.f32.gmra.mrb[0].mxu0 %v345
        %v623 = vpop.f32.mrb[0].mxu0
        %v624 = vadd.f32 0.0, %v623
        %v625 = vpop.f32.mrb[0].mxu0
        %626 = vmatprep.mubr.f32.mxu0 0.0
        %627 = vmatmul.mubr.f32.gmra.mrb[0].mxu0 %v348
        %v628 = vpop.f32.mrb[0].mxu0
        %v629 = vadd.f32 0.0, %v628
        %v630 = vpop.f32.mrb[0].mxu0
        %631 = vmatprep.mubr.f32.mxu0 0.0
        %632 = vmatmul.mubr.f32.gmra.mrb[0].mxu0 %v351
        %v633 = vpop.f32.mrb[0].mxu0
        %v634 = vadd.f32 0.0, %v633
        %v635 = vpop.f32.mrb[0].mxu0
        %636 = vmatprep.mubr.f32.mxu0 0.0
        %637 = vmatmul.mubr.f32.gmra.mrb[0].mxu0 %v354
        %v638 = vpop.f32.mrb[0].mxu0
        %v639 = vadd.f32 0.0, %v638
        %v640 = vpop.f32.mrb[0].mxu0
        %641 = vmatprep.mubr.f32.mxu0 0.0
        %642 = vmatmul.mubr.f32.gmra.mrb[0].mxu0 %v357
        %v643 = vpop.f32.mrb[0].mxu0
        %v644 = vadd.f32 0.0, %v643
        %v645 = vpop.f32.mrb[0].mxu0
        %646 = vmatprep.mubr.f32.mxu0 0.0
        %647 = vmatmul.mubr.f32.gmra.mrb[0].mxu0 %v360
        %v648 = vpop.f32.mrb[0].mxu0
        %v649 = vadd.f32 0.0, %v648
        %v650 = vpop.f32.mrb[0].mxu0
        %651 = vmatprep.mubr.f32.mxu0 0.0
        %652 = vmatmul.mubr.f32.gmra.mrb[0].mxu0 %v363
        %v653 = vpop.f32.mrb[0].mxu0
        %v654 = vadd.f32 0.0, %v653
        %v655 = vpop.f32.mrb[0].mxu0
        %656 = vmatprep.mubr.f32.mxu0 0.0
        %657 = vmatmul.mubr.f32.gmra.mrb[0].mxu0 %v366
        %v658 = vpop.f32.mrb[0].mxu0
        %v659 = vadd.f32 0.0, %v658
        %v660 = vpop.f32.mrb[0].mxu0
        %661 = vdwg.mxu0
        %vm662 = vcmask 64512
        %v664 = vsel %vm662, %v299, 0
        %666 = vmatprep.subr.mxu0 0.0
        %667 = vmatpush1.msra.mxu0 %v435
        %668 = vmatprep.subr.mxu0 0.0
        %669 = vmatpush1.msra.mxu0 0.0
        %670 = vmatprep.subr.mxu0 0.0
        %671 = vmatpush1.msra.mxu0 0.0
        %672 = vmatprep.subr.mxu0 0.0
        %673 = vmatpush1.msra.mxu0 0.0
        %674 = vmatprep.subr.mxu0 0.0
        %675 = vmatpush1.msra.mxu0 0.0
        %676 = vmatprep.subr.mxu0 0.0
        %677 = vmatpush1.msra.mxu0 0.0
        %678 = vmatprep.subr.mxu0 0.0
        %679 = vmatpush1.msra.mxu0 0.0
        %680 = vmatprep.subr.mxu0 0.0
        %681 = vmatpush1.msra.mxu0 0.0
        %682 = vmatprep.subr.mxu0 0.0
        %683 = vmatpush1.msra.mxu0 0.0
        %684 = vmatprep.subr.mxu0 0.0
        %685 = vmatpush1.msra.mxu0 0.0
        %686 = vmatprep.subr.mxu0 0.0
        %687 = vmatpush1.msra.mxu0 0.0
        %688 = vmatprep.subr.mxu0 0.0
        %689 = vmatpush1.msra.mxu0 0.0
        %690 = vmatprep.subr.mxu0 0.0
        %691 = vmatpush1.msra.mxu0 0.0
        %692 = vmatprep.subr.mxu0 0.0
        %693 = vmatpush1.msra.mxu0 0.0
        %694 = vmatprep.subr.mxu0 0.0
        %695 = vmatpush1.msra.mxu0 0.0
        %696 = vmatprep.subr.mxu0 0.0
        %697 = vmatpush1.msra.mxu0 0.0
        %698 = vmatprep.subr.mxu0 0.0
        %699 = vmatpush1.msra.mxu0 0.0
        %700 = vmatprep.subr.mxu0 0.0
        %701 = vmatpush1.msra.mxu0 0.0
        %702 = vmatprep.subr.mxu0 0.0
        %703 = vmatpush1.msra.mxu0 0.0
        %704 = vmatprep.subr.mxu0 0.0
        %705 = vmatpush1.msra.mxu0 0.0
        %706 = vmatprep.subr.mxu0 0.0
        %707 = vmatpush1.msra.mxu0 0.0
        %708 = vmatprep.subr.mxu0 0.0
        %709 = vmatpush1.msra.mxu0 0.0
        %710 = vmatprep.subr.mxu0 0.0
        %711 = vmatpush1.msra.mxu0 0.0
        %712 = vmatprep.subr.mxu0 0.0
        %713 = vmatpush1.msra.mxu0 0.0
        %714 = vmatprep.subr.mxu0 0.0
        %715 = vmatpush1.msra.mxu0 0.0
        %716 = vmatprep.subr.mxu0 0.0
        %717 = vmatpush1.msra.mxu0 0.0
        %718 = vmatprep.subr.mxu0 0.0
        %719 = vmatpush1.msra.mxu0 0.0
        %720 = vmatprep.subr.mxu0 0.0
        %721 = vmatpush1.msra.mxu0 0.0
        %722 = vmatprep.subr.mxu0 0.0
        %723 = vmatpush1.msra.mxu0 0.0
        %724 = vmatprep.subr.mxu0 0.0
        %725 = vmatpush1.msra.mxu0 0.0
        %726 = vmatprep.subr.mxu0 0.0
        %727 = vmatpush1.msra.mxu0 0.0
        %728 = vmatprep.subr.mxu0 0.0
        %729 = vmatpush1.msra.mxu0 0.0
        %730 = vmatprep.mubr.f32.mxu0 0.0
        %731 = vmatmul.mubr.f32.gmra.mrb[0].mxu0 %v664
        %v732 = vpop.f32.mrb[0].mxu0
        %v733 = vadd.f32 0.0, %v732
        %v734 = vpop.f32.mrb[0].mxu0
        %735 = vdwg.mxu0
        %v737 = vsel %vm662, %v300, 0
        %739 = vmatprep.subr.mxu0 0.0
        %740 = vmatpush1.msra.mxu0 %v440
        %741 = vmatprep.subr.mxu0 0.0
        %742 = vmatpush1.msra.mxu0 0.0
        %743 = vmatprep.subr.mxu0 0.0
        %744 = vmatpush1.msra.mxu0 0.0
        %745 = vmatprep.subr.mxu0 0.0
        %746 = vmatpush1.msra.mxu0 0.0
        %747 = vmatprep.subr.mxu0 0.0
        %748 = vmatpush1.msra.mxu0 0.0
        %749 = vmatprep.subr.mxu0 0.0
        %750 = vmatpush1.msra.mxu0 0.0
        %751 = vmatprep.subr.mxu0 0.0
        %752 = vmatpush1.msra.mxu0 0.0
        %753 = vmatprep.subr.mxu0 0.0
        %754 = vmatpush1.msra.mxu0 0.0
        %755 = vmatprep.subr.mxu0 0.0
        %756 = vmatpush1.msra.mxu0 0.0
        %757 = vmatprep.subr.mxu0 0.0
        %758 = vmatpush1.msra.mxu0 0.0
        %759 = vmatprep.subr.mxu0 0.0
        %760 = vmatpush1.msra.mxu0 0.0
        %761 = vmatprep.subr.mxu0 0.0
        %762 = vmatpush1.msra.mxu0 0.0
        %763 = vmatprep.subr.mxu0 0.0
        %764 = vmatpush1.msra.mxu0 0.0
        %765 = vmatprep.subr.mxu0 0.0
        %766 = vmatpush1.msra.mxu0 0.0
        %767 = vmatprep.subr.mxu0 0.0
        %768 = vmatpush1.msra.mxu0 0.0
        %769 = vmatprep.subr.mxu0 0.0
        %770 = vmatpush1.msra.mxu0 0.0
        %771 = vmatprep.subr.mxu0 0.0
        %772 = vmatpush1.msra.mxu0 0.0
        %773 = vmatprep.subr.mxu0 0.0
        %774 = vmatpush1.msra.mxu0 0.0
        %775 = vmatprep.subr.mxu0 0.0
        %776 = vmatpush1.msra.mxu0 0.0
        %777 = vmatprep.subr.mxu0 0.0
        %778 = vmatpush1.msra.mxu0 0.0
        %779 = vmatprep.subr.mxu0 0.0
        %780 = vmatpush1.msra.mxu0 0.0
        %781 = vmatprep.subr.mxu0 0.0
        %782 = vmatpush1.msra.mxu0 0.0
        %783 = vmatprep.subr.mxu0 0.0
        %784 = vmatpush1.msra.mxu0 0.0
        %785 = vmatprep.subr.mxu0 0.0
        %786 = vmatpush1.msra.mxu0 0.0
        %787 = vmatprep.subr.mxu0 0.0
        %788 = vmatpush1.msra.mxu0 0.0
        %789 = vmatprep.subr.mxu0 0.0
        %790 = vmatpush1.msra.mxu0 0.0
        %791 = vmatprep.subr.mxu0 0.0
        %792 = vmatpush1.msra.mxu0 0.0
        %793 = vmatprep.subr.mxu0 0.0
        %794 = vmatpush1.msra.mxu0 0.0
        %795 = vmatprep.subr.mxu0 0.0
        %796 = vmatpush1.msra.mxu0 0.0
        %797 = vmatprep.subr.mxu0 0.0
        %798 = vmatpush1.msra.mxu0 0.0
        %799 = vmatprep.subr.mxu0 0.0
        %800 = vmatpush1.msra.mxu0 0.0
        %801 = vmatprep.subr.mxu0 0.0
        %802 = vmatpush1.msra.mxu0 0.0
        %803 = vmatprep.mubr.f32.mxu0 0.0
        %804 = vmatmul.mubr.f32.gmra.mrb[0].mxu0 %v737
        %v805 = vpop.f32.mrb[0].mxu0
        %v806 = vadd.f32 0.0, %v805
        %v807 = vpop.f32.mrb[0].mxu0
        %808 = vdwg.mxu0
        %v810 = vsel %vm662, %v301, 0
        %812 = vmatprep.subr.mxu0 0.0
        %813 = vmatpush1.msra.mxu0 %v445
        %814 = vmatprep.subr.mxu0 0.0
        %815 = vmatpush1.msra.mxu0 0.0
        %816 = vmatprep.subr.mxu0 0.0
        %817 = vmatpush1.msra.mxu0 0.0
        %818 = vmatprep.subr.mxu0 0.0
        %819 = vmatpush1.msra.mxu0 0.0
        %820 = vmatprep.subr.mxu0 0.0
        %821 = vmatpush1.msra.mxu0 0.0
        %822 = vmatprep.subr.mxu0 0.0
        %823 = vmatpush1.msra.mxu0 0.0
        %824 = vmatprep.subr.mxu0 0.0
        %825 = vmatpush1.msra.mxu0 0.0
        %826 = vmatprep.subr.mxu0 0.0
        %827 = vmatpush1.msra.mxu0 0.0
        %828 = vmatprep.subr.mxu0 0.0
        %829 = vmatpush1.msra.mxu0 0.0
        %830 = vmatprep.subr.mxu0 0.0
        %831 = vmatpush1.msra.mxu0 0.0
        %832 = vmatprep.subr.mxu0 0.0
        %833 = vmatpush1.msra.mxu0 0.0
        %834 = vmatprep.subr.mxu0 0.0
        %835 = vmatpush1.msra.mxu0 0.0
        %836 = vmatprep.subr.mxu0 0.0
        %837 = vmatpush1.msra.mxu0 0.0
        %838 = vmatprep.subr.mxu0 0.0
        %839 = vmatpush1.msra.mxu0 0.0
        %840 = vmatprep.subr.mxu0 0.0
        %841 = vmatpush1.msra.mxu0 0.0
        %842 = vmatprep.subr.mxu0 0.0
        %843 = vmatpush1.msra.mxu0 0.0
        %844 = vmatprep.subr.mxu0 0.0
        %845 = vmatpush1.msra.mxu0 0.0
        %846 = vmatprep.subr.mxu0 0.0
        %847 = vmatpush1.msra.mxu0 0.0
        %848 = vmatprep.subr.mxu0 0.0
        %849 = vmatpush1.msra.mxu0 0.0
        %850 = vmatprep.subr.mxu0 0.0
        %851 = vmatpush1.msra.mxu0 0.0
        %852 = vmatprep.subr.mxu0 0.0
        %853 = vmatpush1.msra.mxu0 0.0
        %854 = vmatprep.subr.mxu0 0.0
        %855 = vmatpush1.msra.mxu0 0.0
        %856 = vmatprep.subr.mxu0 0.0
        %857 = vmatpush1.msra.mxu0 0.0
        %858 = vmatprep.subr.mxu0 0.0
        %859 = vmatpush1.msra.mxu0 0.0
        %860 = vmatprep.subr.mxu0 0.0
        %861 = vmatpush1.msra.mxu0 0.0
        %862 = vmatprep.subr.mxu0 0.0
        %863 = vmatpush1.msra.mxu0 0.0
        %864 = vmatprep.subr.mxu0 0.0
        %865 = vmatpush1.msra.mxu0 0.0
        %866 = vmatprep.subr.mxu0 0.0
        %867 = vmatpush1.msra.mxu0 0.0
        %868 = vmatprep.subr.mxu0 0.0
        %869 = vmatpush1.msra.mxu0 0.0
        %870 = vmatprep.subr.mxu0 0.0
        %871 = vmatpush1.msra.mxu0 0.0
        %872 = vmatprep.subr.mxu0 0.0
        %873 = vmatpush1.msra.mxu0 0.0
        %874 = vmatprep.subr.mxu0 0.0
        %875 = vmatpush1.msra.mxu0 0.0
        %876 = vmatprep.mubr.f32.mxu0 0.0
        %877 = vmatmul.mubr.f32.gmra.mrb[0].mxu0 %v810
        %v878 = vpop.f32.mrb[0].mxu0
        %v879 = vadd.f32 0.0, %v878
        %v880 = vpop.f32.mrb[0].mxu0
        %881 = vdwg.mxu0
        %v883 = vsel %vm662, %v302, 0
        %885 = vmatprep.subr.mxu0 0.0
        %886 = vmatpush1.msra.mxu0 %v450
        %887 = vmatprep.subr.mxu0 0.0
        %888 = vmatpush1.msra.mxu0 0.0
        %889 = vmatprep.subr.mxu0 0.0
        %890 = vmatpush1.msra.mxu0 0.0
        %891 = vmatprep.subr.mxu0 0.0
        %892 = vmatpush1.msra.mxu0 0.0
        %893 = vmatprep.subr.mxu0 0.0
        %894 = vmatpush1.msra.mxu0 0.0
        %895 = vmatprep.subr.mxu0 0.0
        %896 = vmatpush1.msra.mxu0 0.0
        %897 = vmatprep.subr.mxu0 0.0
        %898 = vmatpush1.msra.mxu0 0.0
        %899 = vmatprep.subr.mxu0 0.0
        %900 = vmatpush1.msra.mxu0 0.0
        %901 = vmatprep.subr.mxu0 0.0
        %902 = vmatpush1.msra.mxu0 0.0
        %903 = vmatprep.subr.mxu0 0.0
        %904 = vmatpush1.msra.mxu0 0.0
        %905 = vmatprep.subr.mxu0 0.0
        %906 = vmatpush1.msra.mxu0 0.0
        %907 = vmatprep.subr.mxu0 0.0
        %908 = vmatpush1.msra.mxu0 0.0
        %909 = vmatprep.subr.mxu0 0.0
        %910 = vmatpush1.msra.mxu0 0.0
        %911 = vmatprep.subr.mxu0 0.0
        %912 = vmatpush1.msra.mxu0 0.0
        %913 = vmatprep.subr.mxu0 0.0
        %914 = vmatpush1.msra.mxu0 0.0
        %915 = vmatprep.subr.mxu0 0.0
        %916 = vmatpush1.msra.mxu0 0.0
        %917 = vmatprep.subr.mxu0 0.0
        %918 = vmatpush1.msra.mxu0 0.0
        %919 = vmatprep.subr.mxu0 0.0
        %920 = vmatpush1.msra.mxu0 0.0
        %921 = vmatprep.subr.mxu0 0.0
        %922 = vmatpush1.msra.mxu0 0.0
        %923 = vmatprep.subr.mxu0 0.0
        %924 = vmatpush1.msra.mxu0 0.0
        %925 = vmatprep.subr.mxu0 0.0
        %926 = vmatpush1.msra.mxu0 0.0
        %927 = vmatprep.subr.mxu0 0.0
        %928 = vmatpush1.msra.mxu0 0.0
        %929 = vmatprep.subr.mxu0 0.0
        %930 = vmatpush1.msra.mxu0 0.0
        %931 = vmatprep.subr.mxu0 0.0
        %932 = vmatpush1.msra.mxu0 0.0
        %933 = vmatprep.subr.mxu0 0.0
        %934 = vmatpush1.msra.mxu0 0.0
        %935 = vmatprep.subr.mxu0 0.0
        %936 = vmatpush1.msra.mxu0 0.0
        %937 = vmatprep.subr.mxu0 0.0
        %938 = vmatpush1.msra.mxu0 0.0
        %939 = vmatprep.subr.mxu0 0.0
        %940 = vmatpush1.msra.mxu0 0.0
        %941 = vmatprep.subr.mxu0 0.0
        %942 = vmatpush1.msra.mxu0 0.0
        %943 = vmatprep.subr.mxu0 0.0
        %944 = vmatpush1.msra.mxu0 0.0
        %945 = vmatprep.subr.mxu0 0.0
        %946 = vmatpush1.msra.mxu0 0.0
        %947 = vmatprep.subr.mxu0 0.0
        %948 = vmatpush1.msra.mxu0 0.0
        %949 = vmatprep.mubr.f32.mxu0 0.0
        %950 = vmatmul.mubr.f32.gmra.mrb[0].mxu0 %v883
        %v951 = vpop.f32.mrb[0].mxu0
        %v952 = vadd.f32 0.0, %v951
        %v953 = vpop.f32.mrb[0].mxu0
        %954 = vdwg.mxu0
        %v956 = vsel %vm662, %v303, 0
        %958 = vmatprep.subr.mxu0 0.0
        %959 = vmatpush1.msra.mxu0 %v455
        %960 = vmatprep.subr.mxu0 0.0
        %961 = vmatpush1.msra.mxu0 0.0
        %962 = vmatprep.subr.mxu0 0.0
        %963 = vmatpush1.msra.mxu0 0.0
        %964 = vmatprep.subr.mxu0 0.0
        %965 = vmatpush1.msra.mxu0 0.0
        %966 = vmatprep.subr.mxu0 0.0
        %967 = vmatpush1.msra.mxu0 0.0
        %968 = vmatprep.subr.mxu0 0.0
        %969 = vmatpush1.msra.mxu0 0.0
        %970 = vmatprep.subr.mxu0 0.0
        %971 = vmatpush1.msra.mxu0 0.0
        %972 = vmatprep.subr.mxu0 0.0
        %973 = vmatpush1.msra.mxu0 0.0
        %974 = vmatprep.subr.mxu0 0.0
        %975 = vmatpush1.msra.mxu0 0.0
        %976 = vmatprep.subr.mxu0 0.0
        %977 = vmatpush1.msra.mxu0 0.0
        %978 = vmatprep.subr.mxu0 0.0
        %979 = vmatpush1.msra.mxu0 0.0
        %980 = vmatprep.subr.mxu0 0.0
        %981 = vmatpush1.msra.mxu0 0.0
        %982 = vmatprep.subr.mxu0 0.0
        %983 = vmatpush1.msra.mxu0 0.0
        %984 = vmatprep.subr.mxu0 0.0
        %985 = vmatpush1.msra.mxu0 0.0
        %986 = vmatprep.subr.mxu0 0.0
        %987 = vmatpush1.msra.mxu0 0.0
        %988 = vmatprep.subr.mxu0 0.0
        %989 = vmatpush1.msra.mxu0 0.0
        %990 = vmatprep.subr.mxu0 0.0
        %991 = vmatpush1.msra.mxu0 0.0
        %992 = vmatprep.subr.mxu0 0.0
        %993 = vmatpush1.msra.mxu0 0.0
        %994 = vmatprep.subr.mxu0 0.0
        %995 = vmatpush1.msra.mxu0 0.0
        %996 = vmatprep.subr.mxu0 0.0
        %997 = vmatpush1.msra.mxu0 0.0
        %998 = vmatprep.subr.mxu0 0.0
        %999 = vmatpush1.msra.mxu0 0.0
        %1000 = vmatprep.subr.mxu0 0.0
        %1001 = vmatpush1.msra.mxu0 0.0
        %1002 = vmatprep.subr.mxu0 0.0
        %1003 = vmatpush1.msra.mxu0 0.0
        %1004 = vmatprep.subr.mxu0 0.0
        %1005 = vmatpush1.msra.mxu0 0.0
        %1006 = vmatprep.subr.mxu0 0.0
        %1007 = vmatpush1.msra.mxu0 0.0
        %1008 = vmatprep.subr.mxu0 0.0
        %1009 = vmatpush1.msra.mxu0 0.0
        %1010 = vmatprep.subr.mxu0 0.0
        %1011 = vmatpush1.msra.mxu0 0.0
        %1012 = vmatprep.subr.mxu0 0.0
        %1013 = vmatpush1.msra.mxu0 0.0
        %1014 = vmatprep.subr.mxu0 0.0
        %1015 = vmatpush1.msra.mxu0 0.0
        %1016 = vmatprep.subr.mxu0 0.0
        %1017 = vmatpush1.msra.mxu0 0.0
        %1018 = vmatprep.subr.mxu0 0.0
        %1019 = vmatpush1.msra.mxu0 0.0
        %1020 = vmatprep.subr.mxu0 0.0
        %1021 = vmatpush1.msra.mxu0 0.0
        %1022 = vmatprep.mubr.f32.mxu0 0.0
        %1023 = vmatmul.mubr.f32.gmra.mrb[0].mxu0 %v956
        %v1024 = vpop.f32.mrb[0].mxu0
        %v1025 = vadd.f32 0.0, %v1024
        %v1026 = vpop.f32.mrb[0].mxu0
        %1027 = vdwg.mxu0
        %v1029 = vsel %vm662, %v304, 0
        %1031 = vmatprep.subr.mxu0 0.0
        %1032 = vmatpush1.msra.mxu0 %v460
        %1033 = vmatprep.subr.mxu0 0.0
        %1034 = vmatpush1.msra.mxu0 0.0
        %1035 = vmatprep.subr.mxu0 0.0
        %1036 = vmatpush1.msra.mxu0 0.0
        %1037 = vmatprep.subr.mxu0 0.0
        %1038 = vmatpush1.msra.mxu0 0.0
        %1039 = vmatprep.subr.mxu0 0.0
        %1040 = vmatpush1.msra.mxu0 0.0
        %1041 = vmatprep.subr.mxu0 0.0
        %1042 = vmatpush1.msra.mxu0 0.0
        %1043 = vmatprep.subr.mxu0 0.0
        %1044 = vmatpush1.msra.mxu0 0.0
        %1045 = vmatprep.subr.mxu0 0.0
        %1046 = vmatpush1.msra.mxu0 0.0
        %1047 = vmatprep.subr.mxu0 0.0
        %1048 = vmatpush1.msra.mxu0 0.0
        %1049 = vmatprep.subr.mxu0 0.0
        %1050 = vmatpush1.msra.mxu0 0.0
        %1051 = vmatprep.subr.mxu0 0.0
        %1052 = vmatpush1.msra.mxu0 0.0
        %1053 = vmatprep.subr.mxu0 0.0
        %1054 = vmatpush1.msra.mxu0 0.0
        %1055 = vmatprep.subr.mxu0 0.0
        %1056 = vmatpush1.msra.mxu0 0.0
        %1057 = vmatprep.subr.mxu0 0.0
        %1058 = vmatpush1.msra.mxu0 0.0
        %1059 = vmatprep.subr.mxu0 0.0
        %1060 = vmatpush1.msra.mxu0 0.0
        %1061 = vmatprep.subr.mxu0 0.0
        %1062 = vmatpush1.msra.mxu0 0.0
        %1063 = vmatprep.subr.mxu0 0.0
        %1064 = vmatpush1.msra.mxu0 0.0
        %1065 = vmatprep.subr.mxu0 0.0
        %1066 = vmatpush1.msra.mxu0 0.0
        %1067 = vmatprep.subr.mxu0 0.0
        %1068 = vmatpush1.msra.mxu0 0.0
        %1069 = vmatprep.subr.mxu0 0.0
        %1070 = vmatpush1.msra.mxu0 0.0
        %1071 = vmatprep.subr.mxu0 0.0
        %1072 = vmatpush1.msra.mxu0 0.0
        %1073 = vmatprep.subr.mxu0 0.0
        %1074 = vmatpush1.msra.mxu0 0.0
        %1075 = vmatprep.subr.mxu0 0.0
        %1076 = vmatpush1.msra.mxu0 0.0
        %1077 = vmatprep.subr.mxu0 0.0
        %1078 = vmatpush1.msra.mxu0 0.0
        %1079 = vmatprep.subr.mxu0 0.0
        %1080 = vmatpush1.msra.mxu0 0.0
        %1081 = vmatprep.subr.mxu0 0.0
        %1082 = vmatpush1.msra.mxu0 0.0
        %1083 = vmatprep.subr.mxu0 0.0
        %1084 = vmatpush1.msra.mxu0 0.0
        %1085 = vmatprep.subr.mxu0 0.0
        %1086 = vmatpush1.msra.mxu0 0.0
        %1087 = vmatprep.subr.mxu0 0.0
        %1088 = vmatpush1.msra.mxu0 0.0
        %1089 = vmatprep.subr.mxu0 0.0
        %1090 = vmatpush1.msra.mxu0 0.0
        %1091 = vmatprep.subr.mxu0 0.0
        %1092 = vmatpush1.msra.mxu0 0.0
        %1093 = vmatprep.subr.mxu0 0.0
        %1094 = vmatpush1.msra.mxu0 0.0
        %1095 = vmatprep.mubr.f32.mxu0 0.0
        %1096 = vmatmul.mubr.f32.gmra.mrb[0].mxu0 %v1029
        %v1097 = vpop.f32.mrb[0].mxu0
        %v1098 = vadd.f32 0.0, %v1097
        %v1099 = vpop.f32.mrb[0].mxu0
        %1100 = vdwg.mxu0
        %v1102 = vsel %vm662, %v305, 0
        %1104 = vmatprep.subr.mxu0 0.0
        %1105 = vmatpush1.msra.mxu0 %v465
        %1106 = vmatprep.subr.mxu0 0.0
        %1107 = vmatpush1.msra.mxu0 0.0
        %1108 = vmatprep.subr.mxu0 0.0
        %1109 = vmatpush1.msra.mxu0 0.0
        %1110 = vmatprep.subr.mxu0 0.0
        %1111 = vmatpush1.msra.mxu0 0.0
        %1112 = vmatprep.subr.mxu0 0.0
        %1113 = vmatpush1.msra.mxu0 0.0
        %1114 = vmatprep.subr.mxu0 0.0
        %1115 = vmatpush1.msra.mxu0 0.0
        %1116 = vmatprep.subr.mxu0 0.0
        %1117 = vmatpush1.msra.mxu0 0.0
        %1118 = vmatprep.subr.mxu0 0.0
        %1119 = vmatpush1.msra.mxu0 0.0
        %1120 = vmatprep.subr.mxu0 0.0
        %1121 = vmatpush1.msra.mxu0 0.0
        %1122 = vmatprep.subr.mxu0 0.0
        %1123 = vmatpush1.msra.mxu0 0.0
        %1124 = vmatprep.subr.mxu0 0.0
        %1125 = vmatpush1.msra.mxu0 0.0
        %1126 = vmatprep.subr.mxu0 0.0
        %1127 = vmatpush1.msra.mxu0 0.0
        %1128 = vmatprep.subr.mxu0 0.0
        %1129 = vmatpush1.msra.mxu0 0.0
        %1130 = vmatprep.subr.mxu0 0.0
        %1131 = vmatpush1.msra.mxu0 0.0
        %1132 = vmatprep.subr.mxu0 0.0
        %1133 = vmatpush1.msra.mxu0 0.0
        %1134 = vmatprep.subr.mxu0 0.0
        %1135 = vmatpush1.msra.mxu0 0.0
        %1136 = vmatprep.subr.mxu0 0.0
        %1137 = vmatpush1.msra.mxu0 0.0
        %1138 = vmatprep.subr.mxu0 0.0
        %1139 = vmatpush1.msra.mxu0 0.0
        %1140 = vmatprep.subr.mxu0 0.0
        %1141 = vmatpush1.msra.mxu0 0.0
        %1142 = vmatprep.subr.mxu0 0.0
        %1143 = vmatpush1.msra.mxu0 0.0
        %1144 = vmatprep.subr.mxu0 0.0
        %1145 = vmatpush1.msra.mxu0 0.0
        %1146 = vmatprep.subr.mxu0 0.0
        %1147 = vmatpush1.msra.mxu0 0.0
        %1148 = vmatprep.subr.mxu0 0.0
        %1149 = vmatpush1.msra.mxu0 0.0
        %1150 = vmatprep.subr.mxu0 0.0
        %1151 = vmatpush1.msra.mxu0 0.0
        %1152 = vmatprep.subr.mxu0 0.0
        %1153 = vmatpush1.msra.mxu0 0.0
        %1154 = vmatprep.subr.mxu0 0.0
        %1155 = vmatpush1.msra.mxu0 0.0
        %1156 = vmatprep.subr.mxu0 0.0
        %1157 = vmatpush1.msra.mxu0 0.0
        %1158 = vmatprep.subr.mxu0 0.0
        %1159 = vmatpush1.msra.mxu0 0.0
        %1160 = vmatprep.subr.mxu0 0.0
        %1161 = vmatpush1.msra.mxu0 0.0
        %1162 = vmatprep.subr.mxu0 0.0
        %1163 = vmatpush1.msra.mxu0 0.0
        %1164 = vmatprep.subr.mxu0 0.0
        %1165 = vmatpush1.msra.mxu0 0.0
        %1166 = vmatprep.subr.mxu0 0.0
        %1167 = vmatpush1.msra.mxu0 0.0
        %1168 = vmatprep.mubr.f32.mxu0 0.0
        %1169 = vmatmul.mubr.f32.gmra.mrb[0].mxu0 %v1102
        %v1170 = vpop.f32.mrb[0].mxu0
        %v1171 = vadd.f32 0.0, %v1170
        %v1172 = vpop.f32.mrb[0].mxu0
        %1173 = vdwg.mxu0
        %v1175 = vsel %vm662, %v306, 0
        %1177 = vmatprep.subr.mxu0 0.0
        %1178 = vmatpush1.msra.mxu0 %v470
        %1179 = vmatprep.subr.mxu0 0.0
        %1180 = vmatpush1.msra.mxu0 0.0
        %1181 = vmatprep.subr.mxu0 0.0
        %1182 = vmatpush1.msra.mxu0 0.0
        %1183 = vmatprep.subr.mxu0 0.0
        %1184 = vmatpush1.msra.mxu0 0.0
        %1185 = vmatprep.subr.mxu0 0.0
        %1186 = vmatpush1.msra.mxu0 0.0
        %1187 = vmatprep.subr.mxu0 0.0
        %1188 = vmatpush1.msra.mxu0 0.0
        %1189 = vmatprep.subr.mxu0 0.0
        %1190 = vmatpush1.msra.mxu0 0.0
        %1191 = vmatprep.subr.mxu0 0.0
        %1192 = vmatpush1.msra.mxu0 0.0
        %1193 = vmatprep.subr.mxu0 0.0
        %1194 = vmatpush1.msra.mxu0 0.0
        %1195 = vmatprep.subr.mxu0 0.0
        %1196 = vmatpush1.msra.mxu0 0.0
        %1197 = vmatprep.subr.mxu0 0.0
        %1198 = vmatpush1.msra.mxu0 0.0
        %1199 = vmatprep.subr.mxu0 0.0
        %1200 = vmatpush1.msra.mxu0 0.0
        %1201 = vmatprep.subr.mxu0 0.0
        %1202 = vmatpush1.msra.mxu0 0.0
        %1203 = vmatprep.subr.mxu0 0.0
        %1204 = vmatpush1.msra.mxu0 0.0
        %1205 = vmatprep.subr.mxu0 0.0
        %1206 = vmatpush1.msra.mxu0 0.0
        %1207 = vmatprep.subr.mxu0 0.0
        %1208 = vmatpush1.msra.mxu0 0.0
        %1209 = vmatprep.subr.mxu0 0.0
        %1210 = vmatpush1.msra.mxu0 0.0
        %1211 = vmatprep.subr.mxu0 0.0
        %1212 = vmatpush1.msra.mxu0 0.0
        %1213 = vmatprep.subr.mxu0 0.0
        %1214 = vmatpush1.msra.mxu0 0.0
        %1215 = vmatprep.subr.mxu0 0.0
        %1216 = vmatpush1.msra.mxu0 0.0
        %1217 = vmatprep.subr.mxu0 0.0
        %1218 = vmatpush1.msra.mxu0 0.0
        %1219 = vmatprep.subr.mxu0 0.0
        %1220 = vmatpush1.msra.mxu0 0.0
        %1221 = vmatprep.subr.mxu0 0.0
        %1222 = vmatpush1.msra.mxu0 0.0
        %1223 = vmatprep.subr.mxu0 0.0
        %1224 = vmatpush1.msra.mxu0 0.0
        %1225 = vmatprep.subr.mxu0 0.0
        %1226 = vmatpush1.msra.mxu0 0.0
        %1227 = vmatprep.subr.mxu0 0.0
        %1228 = vmatpush1.msra.mxu0 0.0
        %1229 = vmatprep.subr.mxu0 0.0
        %1230 = vmatpush1.msra.mxu0 0.0
        %1231 = vmatprep.subr.mxu0 0.0
        %1232 = vmatpush1.msra.mxu0 0.0
        %1233 = vmatprep.subr.mxu0 0.0
        %1234 = vmatpush1.msra.mxu0 0.0
        %1235 = vmatprep.subr.mxu0 0.0
        %1236 = vmatpush1.msra.mxu0 0.0
        %1237 = vmatprep.subr.mxu0 0.0
        %1238 = vmatpush1.msra.mxu0 0.0
        %1239 = vmatprep.subr.mxu0 0.0
        %1240 = vmatpush1.msra.mxu0 0.0
        %1241 = vmatprep.mubr.f32.mxu0 0.0
        %1242 = vmatmul.mubr.f32.gmra.mrb[0].mxu0 %v1175
        %v1243 = vpop.f32.mrb[0].mxu0
        %v1244 = vadd.f32 0.0, %v1243
        %v1245 = vpop.f32.mrb[0].mxu0
        %1246 = vdwg.mxu0
        %v1248 = vsel %vm662, %v307, 0
        %1250 = vmatprep.subr.mxu0 0.0
        %1251 = vmatpush1.msra.mxu0 %v475
        %1252 = vmatprep.subr.mxu0 0.0
        %1253 = vmatpush1.msra.mxu0 0.0
        %1254 = vmatprep.subr.mxu0 0.0
        %1255 = vmatpush1.msra.mxu0 0.0
        %1256 = vmatprep.subr.mxu0 0.0
        %1257 = vmatpush1.msra.mxu0 0.0
        %1258 = vmatprep.subr.mxu0 0.0
        %1259 = vmatpush1.msra.mxu0 0.0
        %1260 = vmatprep.subr.mxu0 0.0
        %1261 = vmatpush1.msra.mxu0 0.0
        %1262 = vmatprep.subr.mxu0 0.0
        %1263 = vmatpush1.msra.mxu0 0.0
        %1264 = vmatprep.subr.mxu0 0.0
        %1265 = vmatpush1.msra.mxu0 0.0
        %1266 = vmatprep.subr.mxu0 0.0
        %1267 = vmatpush1.msra.mxu0 0.0
        %1268 = vmatprep.subr.mxu0 0.0
        %1269 = vmatpush1.msra.mxu0 0.0
        %1270 = vmatprep.subr.mxu0 0.0
        %1271 = vmatpush1.msra.mxu0 0.0
        %1272 = vmatprep.subr.mxu0 0.0
        %1273 = vmatpush1.msra.mxu0 0.0
        %1274 = vmatprep.subr.mxu0 0.0
        %1275 = vmatpush1.msra.mxu0 0.0
        %1276 = vmatprep.subr.mxu0 0.0
        %1277 = vmatpush1.msra.mxu0 0.0
        %1278 = vmatprep.subr.mxu0 0.0
        %1279 = vmatpush1.msra.mxu0 0.0
        %1280 = vmatprep.subr.mxu0 0.0
        %1281 = vmatpush1.msra.mxu0 0.0
        %1282 = vmatprep.subr.mxu0 0.0
        %1283 = vmatpush1.msra.mxu0 0.0
        %1284 = vmatprep.subr.mxu0 0.0
        %1285 = vmatpush1.msra.mxu0 0.0
        %1286 = vmatprep.subr.mxu0 0.0
        %1287 = vmatpush1.msra.mxu0 0.0
        %1288 = vmatprep.subr.mxu0 0.0
        %1289 = vmatpush1.msra.mxu0 0.0
        %1290 = vmatprep.subr.mxu0 0.0
        %1291 = vmatpush1.msra.mxu0 0.0
        %1292 = vmatprep.subr.mxu0 0.0
        %1293 = vmatpush1.msra.mxu0 0.0
        %1294 = vmatprep.subr.mxu0 0.0
        %1295 = vmatpush1.msra.mxu0 0.0
        %1296 = vmatprep.subr.mxu0 0.0
        %1297 = vmatpush1.msra.mxu0 0.0
        %1298 = vmatprep.subr.mxu0 0.0
        %1299 = vmatpush1.msra.mxu0 0.0
        %1300 = vmatprep.subr.mxu0 0.0
        %1301 = vmatpush1.msra.mxu0 0.0
        %1302 = vmatprep.subr.mxu0 0.0
        %1303 = vmatpush1.msra.mxu0 0.0
        %1304 = vmatprep.subr.mxu0 0.0
        %1305 = vmatpush1.msra.mxu0 0.0
        %1306 = vmatprep.subr.mxu0 0.0
        %1307 = vmatpush1.msra.mxu0 0.0
        %1308 = vmatprep.subr.mxu0 0.0
        %1309 = vmatpush1.msra.mxu0 0.0
        %1310 = vmatprep.subr.mxu0 0.0
        %1311 = vmatpush1.msra.mxu0 0.0
        %1312 = vmatprep.subr.mxu0 0.0
        %1313 = vmatpush1.msra.mxu0 0.0
        %1314 = vmatprep.mubr.f32.mxu0 0.0
        %1315 = vmatmul.mubr.f32.gmra.mrb[0].mxu0 %v1248
        %v1316 = vpop.f32.mrb[0].mxu0
        %v1317 = vadd.f32 0.0, %v1316
        %v1318 = vpop.f32.mrb[0].mxu0
        %1319 = vdwg.mxu0
        %v1321 = vsel %vm662, %v308, 0
        %1323 = vmatprep.subr.mxu0 0.0
        %1324 = vmatpush1.msra.mxu0 %v480
        %1325 = vmatprep.subr.mxu0 0.0
        %1326 = vmatpush1.msra.mxu0 0.0
        %1327 = vmatprep.subr.mxu0 0.0
        %1328 = vmatpush1.msra.mxu0 0.0
        %1329 = vmatprep.subr.mxu0 0.0
        %1330 = vmatpush1.msra.mxu0 0.0
        %1331 = vmatprep.subr.mxu0 0.0
        %1332 = vmatpush1.msra.mxu0 0.0
        %1333 = vmatprep.subr.mxu0 0.0
        %1334 = vmatpush1.msra.mxu0 0.0
        %1335 = vmatprep.subr.mxu0 0.0
        %1336 = vmatpush1.msra.mxu0 0.0
        %1337 = vmatprep.subr.mxu0 0.0
        %1338 = vmatpush1.msra.mxu0 0.0
        %1339 = vmatprep.subr.mxu0 0.0
        %1340 = vmatpush1.msra.mxu0 0.0
        %1341 = vmatprep.subr.mxu0 0.0
        %1342 = vmatpush1.msra.mxu0 0.0
        %1343 = vmatprep.subr.mxu0 0.0
        %1344 = vmatpush1.msra.mxu0 0.0
        %1345 = vmatprep.subr.mxu0 0.0
        %1346 = vmatpush1.msra.mxu0 0.0
        %1347 = vmatprep.subr.mxu0 0.0
        %1348 = vmatpush1.msra.mxu0 0.0
        %1349 = vmatprep.subr.mxu0 0.0
        %1350 = vmatpush1.msra.mxu0 0.0
        %1351 = vmatprep.subr.mxu0 0.0
        %1352 = vmatpush1.msra.mxu0 0.0
        %1353 = vmatprep.subr.mxu0 0.0
        %1354 = vmatpush1.msra.mxu0 0.0
        %1355 = vmatprep.subr.mxu0 0.0
        %1356 = vmatpush1.msra.mxu0 0.0
        %1357 = vmatprep.subr.mxu0 0.0
        %1358 = vmatpush1.msra.mxu0 0.0
        %1359 = vmatprep.subr.mxu0 0.0
        %1360 = vmatpush1.msra.mxu0 0.0
        %1361 = vmatprep.subr.mxu0 0.0
        %1362 = vmatpush1.msra.mxu0 0.0
        %1363 = vmatprep.subr.mxu0 0.0
        %1364 = vmatpush1.msra.mxu0 0.0
        %1365 = vmatprep.subr.mxu0 0.0
        %1366 = vmatpush1.msra.mxu0 0.0
        %1367 = vmatprep.subr.mxu0 0.0
        %1368 = vmatpush1.msra.mxu0 0.0
        %1369 = vmatprep.subr.mxu0 0.0
        %1370 = vmatpush1.msra.mxu0 0.0
        %1371 = vmatprep.subr.mxu0 0.0
        %1372 = vmatpush1.msra.mxu0 0.0
        %1373 = vmatprep.subr.mxu0 0.0
        %1374 = vmatpush1.msra.mxu0 0.0
        %1375 = vmatprep.subr.mxu0 0.0
        %1376 = vmatpush1.msra.mxu0 0.0
        %1377 = vmatprep.subr.mxu0 0.0
        %1378 = vmatpush1.msra.mxu0 0.0
        %1379 = vmatprep.subr.mxu0 0.0
        %1380 = vmatpush1.msra.mxu0 0.0
        %1381 = vmatprep.subr.mxu0 0.0
        %1382 = vmatpush1.msra.mxu0 0.0
        %1383 = vmatprep.subr.mxu0 0.0
        %1384 = vmatpush1.msra.mxu0 0.0
        %1385 = vmatprep.subr.mxu0 0.0
        %1386 = vmatpush1.msra.mxu0 0.0
        %1387 = vmatprep.mubr.f32.mxu0 0.0
        %1388 = vmatmul.mubr.f32.gmra.mrb[0].mxu0 %v1321
        %v1389 = vpop.f32.mrb[0].mxu0
        %v1390 = vadd.f32 0.0, %v1389
        %v1391 = vpop.f32.mrb[0].mxu0
        %1392 = vdwg.mxu0
        %v1394 = vsel %vm662, %v309, 0
        %1396 = vmatprep.subr.mxu0 0.0
        %1397 = vmatpush1.msra.mxu0 %v485
        %1398 = vmatprep.subr.mxu0 0.0
        %1399 = vmatpush1.msra.mxu0 0.0
        %1400 = vmatprep.subr.mxu0 0.0
        %1401 = vmatpush1.msra.mxu0 0.0
        %1402 = vmatprep.subr.mxu0 0.0
        %1403 = vmatpush1.msra.mxu0 0.0
        %1404 = vmatprep.subr.mxu0 0.0
        %1405 = vmatpush1.msra.mxu0 0.0
        %1406 = vmatprep.subr.mxu0 0.0
        %1407 = vmatpush1.msra.mxu0 0.0
        %1408 = vmatprep.subr.mxu0 0.0
        %1409 = vmatpush1.msra.mxu0 0.0
        %1410 = vmatprep.subr.mxu0 0.0
        %1411 = vmatpush1.msra.mxu0 0.0
        %1412 = vmatprep.subr.mxu0 0.0
        %1413 = vmatpush1.msra.mxu0 0.0
        %1414 = vmatprep.subr.mxu0 0.0
        %1415 = vmatpush1.msra.mxu0 0.0
        %1416 = vmatprep.subr.mxu0 0.0
        %1417 = vmatpush1.msra.mxu0 0.0
        %1418 = vmatprep.subr.mxu0 0.0
        %1419 = vmatpush1.msra.mxu0 0.0
        %1420 = vmatprep.subr.mxu0 0.0
        %1421 = vmatpush1.msra.mxu0 0.0
        %1422 = vmatprep.subr.mxu0 0.0
        %1423 = vmatpush1.msra.mxu0 0.0
        %1424 = vmatprep.subr.mxu0 0.0
        %1425 = vmatpush1.msra.mxu0 0.0
        %1426 = vmatprep.subr.mxu0 0.0
        %1427 = vmatpush1.msra.mxu0 0.0
        %1428 = vmatprep.subr.mxu0 0.0
        %1429 = vmatpush1.msra.mxu0 0.0
        %1430 = vmatprep.subr.mxu0 0.0
        %1431 = vmatpush1.msra.mxu0 0.0
        %1432 = vmatprep.subr.mxu0 0.0
        %1433 = vmatpush1.msra.mxu0 0.0
        %1434 = vmatprep.subr.mxu0 0.0
        %1435 = vmatpush1.msra.mxu0 0.0
        %1436 = vmatprep.subr.mxu0 0.0
        %1437 = vmatpush1.msra.mxu0 0.0
        %1438 = vmatprep.subr.mxu0 0.0
        %1439 = vmatpush1.msra.mxu0 0.0
        %1440 = vmatprep.subr.mxu0 0.0
        %1441 = vmatpush1.msra.mxu0 0.0
        %1442 = vmatprep.subr.mxu0 0.0
        %1443 = vmatpush1.msra.mxu0 0.0
        %1444 = vmatprep.subr.mxu0 0.0
        %1445 = vmatpush1.msra.mxu0 0.0
        %1446 = vmatprep.subr.mxu0 0.0
        %1447 = vmatpush1.msra.mxu0 0.0
        %1448 = vmatprep.subr.mxu0 0.0
        %1449 = vmatpush1.msra.mxu0 0.0
        %1450 = vmatprep.subr.mxu0 0.0
        %1451 = vmatpush1.msra.mxu0 0.0
        %1452 = vmatprep.subr.mxu0 0.0
        %1453 = vmatpush1.msra.mxu0 0.0
        %1454 = vmatprep.subr.mxu0 0.0
        %1455 = vmatpush1.msra.mxu0 0.0
        %1456 = vmatprep.subr.mxu0 0.0
        %1457 = vmatpush1.msra.mxu0 0.0
        %1458 = vmatprep.subr.mxu0 0.0
        %1459 = vmatpush1.msra.mxu0 0.0
        %1460 = vmatprep.mubr.f32.mxu0 0.0
        %1461 = vmatmul.mubr.f32.gmra.mrb[0].mxu0 %v1394
        %v1462 = vpop.f32.mrb[0].mxu0
        %v1463 = vadd.f32 0.0, %v1462
        %v1464 = vpop.f32.mrb[0].mxu0
        %1465 = vdwg.mxu0
        %v1467 = vsel %vm662, %v310, 0
        %1469 = vmatprep.subr.mxu0 0.0
        %1470 = vmatpush1.msra.mxu0 %v490
        %1471 = vmatprep.subr.mxu0 0.0
        %1472 = vmatpush1.msra.mxu0 0.0
        %1473 = vmatprep.subr.mxu0 0.0
        %1474 = vmatpush1.msra.mxu0 0.0
        %1475 = vmatprep.subr.mxu0 0.0
        %1476 = vmatpush1.msra.mxu0 0.0
        %1477 = vmatprep.subr.mxu0 0.0
        %1478 = vmatpush1.msra.mxu0 0.0
        %1479 = vmatprep.subr.mxu0 0.0
        %1480 = vmatpush1.msra.mxu0 0.0
        %1481 = vmatprep.subr.mxu0 0.0
        %1482 = vmatpush1.msra.mxu0 0.0
        %1483 = vmatprep.subr.mxu0 0.0
        %1484 = vmatpush1.msra.mxu0 0.0
        %1485 = vmatprep.subr.mxu0 0.0
        %1486 = vmatpush1.msra.mxu0 0.0
        %1487 = vmatprep.subr.mxu0 0.0
        %1488 = vmatpush1.msra.mxu0 0.0
        %1489 = vmatprep.subr.mxu0 0.0
        %1490 = vmatpush1.msra.mxu0 0.0
        %1491 = vmatprep.subr.mxu0 0.0
        %1492 = vmatpush1.msra.mxu0 0.0
        %1493 = vmatprep.subr.mxu0 0.0
        %1494 = vmatpush1.msra.mxu0 0.0
        %1495 = vmatprep.subr.mxu0 0.0
        %1496 = vmatpush1.msra.mxu0 0.0
        %1497 = vmatprep.subr.mxu0 0.0
        %1498 = vmatpush1.msra.mxu0 0.0
        %1499 = vmatprep.subr.mxu0 0.0
        %1500 = vmatpush1.msra.mxu0 0.0
        %1501 = vmatprep.subr.mxu0 0.0
        %1502 = vmatpush1.msra.mxu0 0.0
        %1503 = vmatprep.subr.mxu0 0.0
        %1504 = vmatpush1.msra.mxu0 0.0
        %1505 = vmatprep.subr.mxu0 0.0
        %1506 = vmatpush1.msra.mxu0 0.0
        %1507 = vmatprep.subr.mxu0 0.0
        %1508 = vmatpush1.msra.mxu0 0.0
        %1509 = vmatprep.subr.mxu0 0.0
        %1510 = vmatpush1.msra.mxu0 0.0
        %1511 = vmatprep.subr.mxu0 0.0
        %1512 = vmatpush1.msra.mxu0 0.0
        %1513 = vmatprep.subr.mxu0 0.0
        %1514 = vmatpush1.msra.mxu0 0.0
        %1515 = vmatprep.subr.mxu0 0.0
        %1516 = vmatpush1.msra.mxu0 0.0
        %1517 = vmatprep.subr.mxu0 0.0
        %1518 = vmatpush1.msra.mxu0 0.0
        %1519 = vmatprep.subr.mxu0 0.0
        %1520 = vmatpush1.msra.mxu0 0.0
        %1521 = vmatprep.subr.mxu0 0.0
        %1522 = vmatpush1.msra.mxu0 0.0
        %1523 = vmatprep.subr.mxu0 0.0
        %1524 = vmatpush1.msra.mxu0 0.0
        %1525 = vmatprep.subr.mxu0 0.0
        %1526 = vmatpush1.msra.mxu0 0.0
        %1527 = vmatprep.subr.mxu0 0.0
        %1528 = vmatpush1.msra.mxu0 0.0
        %1529 = vmatprep.subr.mxu0 0.0
        %1530 = vmatpush1.msra.mxu0 0.0
        %1531 = vmatprep.subr.mxu0 0.0
        %1532 = vmatpush1.msra.mxu0 0.0
        %1533 = vmatprep.mubr.f32.mxu0 0.0
        %1534 = vmatmul.mubr.f32.gmra.mrb[0].mxu0 %v1467
        %v1535 = vpop.f32.mrb[0].mxu0
        %v1536 = vadd.f32 0.0, %v1535
        %v1537 = vpop.f32.mrb[0].mxu0
        %1538 = vdwg.mxu0
        %v1540 = vsel %vm662, %v311, 0
        %1542 = vmatprep.subr.mxu0 0.0
        %1543 = vmatpush1.msra.mxu0 %v495
        %1544 = vmatprep.subr.mxu0 0.0
        %1545 = vmatpush1.msra.mxu0 0.0
        %1546 = vmatprep.subr.mxu0 0.0
        %1547 = vmatpush1.msra.mxu0 0.0
        %1548 = vmatprep.subr.mxu0 0.0
        %1549 = vmatpush1.msra.mxu0 0.0
        %1550 = vmatprep.subr.mxu0 0.0
        %1551 = vmatpush1.msra.mxu0 0.0
        %1552 = vmatprep.subr.mxu0 0.0
        %1553 = vmatpush1.msra.mxu0 0.0
        %1554 = vmatprep.subr.mxu0 0.0
        %1555 = vmatpush1.msra.mxu0 0.0
        %1556 = vmatprep.subr.mxu0 0.0
        %1557 = vmatpush1.msra.mxu0 0.0
        %1558 = vmatprep.subr.mxu0 0.0
        %1559 = vmatpush1.msra.mxu0 0.0
        %1560 = vmatprep.subr.mxu0 0.0
        %1561 = vmatpush1.msra.mxu0 0.0
        %1562 = vmatprep.subr.mxu0 0.0
        %1563 = vmatpush1.msra.mxu0 0.0
        %1564 = vmatprep.subr.mxu0 0.0
        %1565 = vmatpush1.msra.mxu0 0.0
        %1566 = vmatprep.subr.mxu0 0.0
        %1567 = vmatpush1.msra.mxu0 0.0
        %1568 = vmatprep.subr.mxu0 0.0
        %1569 = vmatpush1.msra.mxu0 0.0
        %1570 = vmatprep.subr.mxu0 0.0
        %1571 = vmatpush1.msra.mxu0 0.0
        %1572 = vmatprep.subr.mxu0 0.0
        %1573 = vmatpush1.msra.mxu0 0.0
        %1574 = vmatprep.subr.mxu0 0.0
        %1575 = vmatpush1.msra.mxu0 0.0
        %1576 = vmatprep.subr.mxu0 0.0
        %1577 = vmatpush1.msra.mxu0 0.0
        %1578 = vmatprep.subr.mxu0 0.0
        %1579 = vmatpush1.msra.mxu0 0.0
        %1580 = vmatprep.subr.mxu0 0.0
        %1581 = vmatpush1.msra.mxu0 0.0
        %1582 = vmatprep.subr.mxu0 0.0
        %1583 = vmatpush1.msra.mxu0 0.0
        %1584 = vmatprep.subr.mxu0 0.0
        %1585 = vmatpush1.msra.mxu0 0.0
        %1586 = vmatprep.subr.mxu0 0.0
        %1587 = vmatpush1.msra.mxu0 0.0
        %1588 = vmatprep.subr.mxu0 0.0
        %1589 = vmatpush1.msra.mxu0 0.0
        %1590 = vmatprep.subr.mxu0 0.0
        %1591 = vmatpush1.msra.mxu0 0.0
        %1592 = vmatprep.subr.mxu0 0.0
        %1593 = vmatpush1.msra.mxu0 0.0
        %1594 = vmatprep.subr.mxu0 0.0
        %1595 = vmatpush1.msra.mxu0 0.0
        %1596 = vmatprep.subr.mxu0 0.0
        %1597 = vmatpush1.msra.mxu0 0.0
        %1598 = vmatprep.subr.mxu0 0.0
        %1599 = vmatpush1.msra.mxu0 0.0
        %1600 = vmatprep.subr.mxu0 0.0
        %1601 = vmatpush1.msra.mxu0 0.0
        %1602 = vmatprep.subr.mxu0 0.0
        %1603 = vmatpush1.msra.mxu0 0.0
        %1604 = vmatprep.subr.mxu0 0.0
        %1605 = vmatpush1.msra.mxu0 0.0
        %1606 = vmatprep.mubr.f32.mxu0 0.0
        %1607 = vmatmul.mubr.f32.gmra.mrb[0].mxu0 %v1540
        %v1608 = vpop.f32.mrb[0].mxu0
        %v1609 = vadd.f32 0.0, %v1608
        %v1610 = vpop.f32.mrb[0].mxu0
        %1611 = vdwg.mxu0
        %v1613 = vsel %vm662, %v312, 0
        %1615 = vmatprep.subr.mxu0 0.0
        %1616 = vmatpush1.msra.mxu0 %v500
        %1617 = vmatprep.subr.mxu0 0.0
        %1618 = vmatpush1.msra.mxu0 0.0
        %1619 = vmatprep.subr.mxu0 0.0
        %1620 = vmatpush1.msra.mxu0 0.0
        %1621 = vmatprep.subr.mxu0 0.0
        %1622 = vmatpush1.msra.mxu0 0.0
        %1623 = vmatprep.subr.mxu0 0.0
        %1624 = vmatpush1.msra.mxu0 0.0
        %1625 = vmatprep.subr.mxu0 0.0
        %1626 = vmatpush1.msra.mxu0 0.0
        %1627 = vmatprep.subr.mxu0 0.0
        %1628 = vmatpush1.msra.mxu0 0.0
        %1629 = vmatprep.subr.mxu0 0.0
        %1630 = vmatpush1.msra.mxu0 0.0
        %1631 = vmatprep.subr.mxu0 0.0
        %1632 = vmatpush1.msra.mxu0 0.0
        %1633 = vmatprep.subr.mxu0 0.0
        %1634 = vmatpush1.msra.mxu0 0.0
        %1635 = vmatprep.subr.mxu0 0.0
        %1636 = vmatpush1.msra.mxu0 0.0
        %1637 = vmatprep.subr.mxu0 0.0
        %1638 = vmatpush1.msra.mxu0 0.0
        %1639 = vmatprep.subr.mxu0 0.0
        %1640 = vmatpush1.msra.mxu0 0.0
        %1641 = vmatprep.subr.mxu0 0.0
        %1642 = vmatpush1.msra.mxu0 0.0
        %1643 = vmatprep.subr.mxu0 0.0
        %1644 = vmatpush1.msra.mxu0 0.0
        %1645 = vmatprep.subr.mxu0 0.0
        %1646 = vmatpush1.msra.mxu0 0.0
        %1647 = vmatprep.subr.mxu0 0.0
        %1648 = vmatpush1.msra.mxu0 0.0
        %1649 = vmatprep.subr.mxu0 0.0
        %1650 = vmatpush1.msra.mxu0 0.0
        %1651 = vmatprep.subr.mxu0 0.0
        %1652 = vmatpush1.msra.mxu0 0.0
        %1653 = vmatprep.subr.mxu0 0.0
        %1654 = vmatpush1.msra.mxu0 0.0
        %1655 = vmatprep.subr.mxu0 0.0
        %1656 = vmatpush1.msra.mxu0 0.0
        %1657 = vmatprep.subr.mxu0 0.0
        %1658 = vmatpush1.msra.mxu0 0.0
        %1659 = vmatprep.subr.mxu0 0.0
        %1660 = vmatpush1.msra.mxu0 0.0
        %1661 = vmatprep.subr.mxu0 0.0
        %1662 = vmatpush1.msra.mxu0 0.0
        %1663 = vmatprep.subr.mxu0 0.0
        %1664 = vmatpush1.msra.mxu0 0.0
        %1665 = vmatprep.subr.mxu0 0.0
        %1666 = vmatpush1.msra.mxu0 0.0
        %1667 = vmatprep.subr.mxu0 0.0
        %1668 = vmatpush1.msra.mxu0 0.0
        %1669 = vmatprep.subr.mxu0 0.0
        %1670 = vmatpush1.msra.mxu0 0.0
        %1671 = vmatprep.subr.mxu0 0.0
        %1672 = vmatpush1.msra.mxu0 0.0
        %1673 = vmatprep.subr.mxu0 0.0
        %1674 = vmatpush1.msra.mxu0 0.0
        %1675 = vmatprep.subr.mxu0 0.0
        %1676 = vmatpush1.msra.mxu0 0.0
        %1677 = vmatprep.subr.mxu0 0.0
        %1678 = vmatpush1.msra.mxu0 0.0
        %1679 = vmatprep.mubr.f32.mxu0 0.0
        %1680 = vmatmul.mubr.f32.gmra.mrb[0].mxu0 %v1613
        %v1681 = vpop.f32.mrb[0].mxu0
        %v1682 = vadd.f32 0.0, %v1681
        %v1683 = vpop.f32.mrb[0].mxu0
        %1684 = vdwg.mxu0
        %v1686 = vsel %vm662, %v313, 0
        %1688 = vmatprep.subr.mxu0 0.0
        %1689 = vmatpush1.msra.mxu0 %v505
        %1690 = vmatprep.subr.mxu0 0.0
        %1691 = vmatpush1.msra.mxu0 0.0
        %1692 = vmatprep.subr.mxu0 0.0
        %1693 = vmatpush1.msra.mxu0 0.0
        %1694 = vmatprep.subr.mxu0 0.0
        %1695 = vmatpush1.msra.mxu0 0.0
        %1696 = vmatprep.subr.mxu0 0.0
        %1697 = vmatpush1.msra.mxu0 0.0
        %1698 = vmatprep.subr.mxu0 0.0
        %1699 = vmatpush1.msra.mxu0 0.0
        %1700 = vmatprep.subr.mxu0 0.0
        %1701 = vmatpush1.msra.mxu0 0.0
        %1702 = vmatprep.subr.mxu0 0.0
        %1703 = vmatpush1.msra.mxu0 0.0
        %1704 = vmatprep.subr.mxu0 0.0
        %1705 = vmatpush1.msra.mxu0 0.0
        %1706 = vmatprep.subr.mxu0 0.0
        %1707 = vmatpush1.msra.mxu0 0.0
        %1708 = vmatprep.subr.mxu0 0.0
        %1709 = vmatpush1.msra.mxu0 0.0
        %1710 = vmatprep.subr.mxu0 0.0
        %1711 = vmatpush1.msra.mxu0 0.0
        %1712 = vmatprep.subr.mxu0 0.0
        %1713 = vmatpush1.msra.mxu0 0.0
        %1714 = vmatprep.subr.mxu0 0.0
        %1715 = vmatpush1.msra.mxu0 0.0
        %1716 = vmatprep.subr.mxu0 0.0
        %1717 = vmatpush1.msra.mxu0 0.0
        %1718 = vmatprep.subr.mxu0 0.0
        %1719 = vmatpush1.msra.mxu0 0.0
        %1720 = vmatprep.subr.mxu0 0.0
        %1721 = vmatpush1.msra.mxu0 0.0
        %1722 = vmatprep.subr.mxu0 0.0
        %1723 = vmatpush1.msra.mxu0 0.0
        %1724 = vmatprep.subr.mxu0 0.0
        %1725 = vmatpush1.msra.mxu0 0.0
        %1726 = vmatprep.subr.mxu0 0.0
        %1727 = vmatpush1.msra.mxu0 0.0
        %1728 = vmatprep.subr.mxu0 0.0
        %1729 = vmatpush1.msra.mxu0 0.0
        %1730 = vmatprep.subr.mxu0 0.0
        %1731 = vmatpush1.msra.mxu0 0.0
        %1732 = vmatprep.subr.mxu0 0.0
        %1733 = vmatpush1.msra.mxu0 0.0
        %1734 = vmatprep.subr.mxu0 0.0
        %1735 = vmatpush1.msra.mxu0 0.0
        %1736 = vmatprep.subr.mxu0 0.0
        %1737 = vmatpush1.msra.mxu0 0.0
        %1738 = vmatprep.subr.mxu0 0.0
        %1739 = vmatpush1.msra.mxu0 0.0
        %1740 = vmatprep.subr.mxu0 0.0
        %1741 = vmatpush1.msra.mxu0 0.0
        %1742 = vmatprep.subr.mxu0 0.0
        %1743 = vmatpush1.msra.mxu0 0.0
        %1744 = vmatprep.subr.mxu0 0.0
        %1745 = vmatpush1.msra.mxu0 0.0
        %1746 = vmatprep.subr.mxu0 0.0
        %1747 = vmatpush1.msra.mxu0 0.0
        %1748 = vmatprep.subr.mxu0 0.0
        %1749 = vmatpush1.msra.mxu0 0.0
        %1750 = vmatprep.subr.mxu0 0.0
        %1751 = vmatpush1.msra.mxu0 0.0
        %1752 = vmatprep.mubr.f32.mxu0 0.0
        %1753 = vmatmul.mubr.f32.gmra.mrb[0].mxu0 %v1686
        %v1754 = vpop.f32.mrb[0].mxu0
        %v1755 = vadd.f32 0.0, %v1754
        %v1756 = vpop.f32.mrb[0].mxu0
        %1757 = vdwg.mxu0
        %v1759 = vsel %vm662, %v314, 0
        %1761 = vmatprep.subr.mxu0 0.0
        %1762 = vmatpush1.msra.mxu0 %v510
        %1763 = vmatprep.subr.mxu0 0.0
        %1764 = vmatpush1.msra.mxu0 0.0
        %1765 = vmatprep.subr.mxu0 0.0
        %1766 = vmatpush1.msra.mxu0 0.0
        %1767 = vmatprep.subr.mxu0 0.0
        %1768 = vmatpush1.msra.mxu0 0.0
        %1769 = vmatprep.subr.mxu0 0.0
        %1770 = vmatpush1.msra.mxu0 0.0
        %1771 = vmatprep.subr.mxu0 0.0
        %1772 = vmatpush1.msra.mxu0 0.0
        %1773 = vmatprep.subr.mxu0 0.0
        %1774 = vmatpush1.msra.mxu0 0.0
        %1775 = vmatprep.subr.mxu0 0.0
        %1776 = vmatpush1.msra.mxu0 0.0
        %1777 = vmatprep.subr.mxu0 0.0
        %1778 = vmatpush1.msra.mxu0 0.0
        %1779 = vmatprep.subr.mxu0 0.0
        %1780 = vmatpush1.msra.mxu0 0.0
        %1781 = vmatprep.subr.mxu0 0.0
        %1782 = vmatpush1.msra.mxu0 0.0
        %1783 = vmatprep.subr.mxu0 0.0
        %1784 = vmatpush1.msra.mxu0 0.0
        %1785 = vmatprep.subr.mxu0 0.0
        %1786 = vmatpush1.msra.mxu0 0.0
        %1787 = vmatprep.subr.mxu0 0.0
        %1788 = vmatpush1.msra.mxu0 0.0
        %1789 = vmatprep.subr.mxu0 0.0
        %1790 = vmatpush1.msra.mxu0 0.0
        %1791 = vmatprep.subr.mxu0 0.0
        %1792 = vmatpush1.msra.mxu0 0.0
        %1793 = vmatprep.subr.mxu0 0.0
        %1794 = vmatpush1.msra.mxu0 0.0
        %1795 = vmatprep.subr.mxu0 0.0
        %1796 = vmatpush1.msra.mxu0 0.0
        %1797 = vmatprep.subr.mxu0 0.0
        %1798 = vmatpush1.msra.mxu0 0.0
        %1799 = vmatprep.subr.mxu0 0.0
        %1800 = vmatpush1.msra.mxu0 0.0
        %1801 = vmatprep.subr.mxu0 0.0
        %1802 = vmatpush1.msra.mxu0 0.0
        %1803 = vmatprep.subr.mxu0 0.0
        %1804 = vmatpush1.msra.mxu0 0.0
        %1805 = vmatprep.subr.mxu0 0.0
        %1806 = vmatpush1.msra.mxu0 0.0
        %1807 = vmatprep.subr.mxu0 0.0
        %1808 = vmatpush1.msra.mxu0 0.0
        %1809 = vmatprep.subr.mxu0 0.0
        %1810 = vmatpush1.msra.mxu0 0.0
        %1811 = vmatprep.subr.mxu0 0.0
        %1812 = vmatpush1.msra.mxu0 0.0
        %1813 = vmatprep.subr.mxu0 0.0
        %1814 = vmatpush1.msra.mxu0 0.0
        %1815 = vmatprep.subr.mxu0 0.0
        %1816 = vmatpush1.msra.mxu0 0.0
        %1817 = vmatprep.subr.mxu0 0.0
        %1818 = vmatpush1.msra.mxu0 0.0
        %1819 = vmatprep.subr.mxu0 0.0
        %1820 = vmatpush1.msra.mxu0 0.0
        %1821 = vmatprep.subr.mxu0 0.0
        %1822 = vmatpush1.msra.mxu0 0.0
        %1823 = vmatprep.subr.mxu0 0.0
        %1824 = vmatpush1.msra.mxu0 0.0
        %1825 = vmatprep.mubr.f32.mxu0 0.0
        %1826 = vmatmul.mubr.f32.gmra.mrb[0].mxu0 %v1759
        %v1827 = vpop.f32.mrb[0].mxu0
        %v1828 = vadd.f32 0.0, %v1827
        %v1829 = vpop.f32.mrb[0].mxu0
        %1830 = vdwg.mxu0
        %v1831 = vsel %vm662, %v299, 0.0
        %1832 = vadd.xlane.f32.xlu0 %v1831
        %v1833 = vpop.xlane.xlu0 %1832
        %v1834 = vsel %vm662, %v300, 0.0
        %1835 = vadd.xlane.f32.xlu0 %v1834
        %v1836 = vpop.xlane.xlu0 %1835
        %v1837 = vsel %vm662, %v301, 0.0
        %1838 = vadd.xlane.f32.xlu0 %v1837
        %v1839 = vpop.xlane.xlu0 %1838
        %v1840 = vsel %vm662, %v302, 0.0
        %1841 = vadd.xlane.f32.xlu0 %v1840
        %v1842 = vpop.xlane.xlu0 %1841
        %v1843 = vsel %vm662, %v303, 0.0
        %1844 = vadd.xlane.f32.xlu0 %v1843
        %v1845 = vpop.xlane.xlu0 %1844
        %v1846 = vsel %vm662, %v304, 0.0
        %1847 = vadd.xlane.f32.xlu0 %v1846
        %v1848 = vpop.xlane.xlu0 %1847
        %v1849 = vsel %vm662, %v305, 0.0
        %1850 = vadd.xlane.f32.xlu0 %v1849
        %v1851 = vpop.xlane.xlu0 %1850
        %v1852 = vsel %vm662, %v306, 0.0
        %1853 = vadd.xlane.f32.xlu0 %v1852
        %v1854 = vpop.xlane.xlu0 %1853
        %v1855 = vsel %vm662, %v307, 0.0
        %1856 = vadd.xlane.f32.xlu0 %v1855
        %v1857 = vpop.xlane.xlu0 %1856
        %v1858 = vsel %vm662, %v308, 0.0
        %1859 = vadd.xlane.f32.xlu0 %v1858
        %v1860 = vpop.xlane.xlu0 %1859
        %v1861 = vsel %vm662, %v309, 0.0
        %1862 = vadd.xlane.f32.xlu0 %v1861
        %v1863 = vpop.xlane.xlu0 %1862
        %v1864 = vsel %vm662, %v310, 0.0
        %1865 = vadd.xlane.f32.xlu0 %v1864
        %v1866 = vpop.xlane.xlu0 %1865
        %v1867 = vsel %vm662, %v311, 0.0
        %1868 = vadd.xlane.f32.xlu0 %v1867
        %v1869 = vpop.xlane.xlu0 %1868
        %v1870 = vsel %vm662, %v312, 0.0
        %1871 = vadd.xlane.f32.xlu0 %v1870
        %v1872 = vpop.xlane.xlu0 %1871
        %v1873 = vsel %vm662, %v313, 0.0
        %1874 = vadd.xlane.f32.xlu0 %v1873
        %v1875 = vpop.xlane.xlu0 %1874
        %v1876 = vsel %vm662, %v314, 0.0
        %1877 = vadd.xlane.f32.xlu0 %v1876
        %v1878 = vpop.xlane.xlu0 %1877
        %v1879 = vrcp.pop %v1833
        %v1880 = vrcp.pop %v1836
        %v1881 = vrcp.pop %v1839
        %v1882 = vrcp.pop %v1842
        %v1883 = vrcp.pop %v1845
        %v1884 = vrcp.pop %v1848
        %v1885 = vrcp.pop %v1851
        %v1886 = vrcp.pop %v1854
        %v1887 = vrcp.pop %v1857
        %v1888 = vrcp.pop %v1860
        %v1889 = vrcp.pop %v1863
        %v1890 = vrcp.pop %v1866
        %v1891 = vrcp.pop %v1869
        %v1892 = vrcp.pop %v1872
        %v1893 = vrcp.pop %v1875
        %v1894 = vrcp.pop %v1878
        %v1895 = vmul.f32 %v733, %v1879
        %v1896 = vmul.f32 %v806, %v1880
        %v1897 = vmul.f32 %v879, %v1881
        %v1898 = vmul.f32 %v952, %v1882
        %v1899 = vmul.f32 %v1025, %v1883
        %v1900 = vmul.f32 %v1098, %v1884
        %v1901 = vmul.f32 %v1171, %v1885
        %v1902 = vmul.f32 %v1244, %v1886
        %v1903 = vmul.f32 %v1317, %v1887
        %v1904 = vmul.f32 %v1390, %v1888
        %v1905 = vmul.f32 %v1463, %v1889
        %v1906 = vmul.f32 %v1536, %v1890
        %v1907 = vmul.f32 %v1609, %v1891
        %v1908 = vmul.f32 %v1682, %v1892
        %v1909 = vmul.f32 %v1755, %v1893
        %v1910 = vmul.f32 %v1828, %v1894
        %v1911 = vadd.f32 %v1895, %v584
        %v1912 = vadd.f32 %v1896, %v589
        %v1913 = vadd.f32 %v1897, %v594
        %v1914 = vadd.f32 %v1898, %v599
        %v1915 = vadd.f32 %v1899, %v604
        %v1916 = vadd.f32 %v1900, %v609
        %v1917 = vadd.f32 %v1901, %v614
        %v1918 = vadd.f32 %v1902, %v619
        %v1919 = vadd.f32 %v1903, %v624
        %v1920 = vadd.f32 %v1904, %v629
        %v1921 = vadd.f32 %v1905, %v634
        %v1922 = vadd.f32 %v1906, %v639
        %v1923 = vadd.f32 %v1907, %v644
        %v1924 = vadd.f32 %v1908, %v649
        %v1925 = vadd.f32 %v1909, %v654
        %v1926 = vadd.f32 %v1910, %v659
        %v1927 = vld [vmem:[%s4] sm:$0x1]
        %v1929 = vlaneseq
        %v1930 = vshrl.u32 %v1929, 7
        %v1931 = vsub.s32 0, %v1930
        %v1932 = vrot.slane %v1927, %v1931
        %v1934 = vadd.f32 %v1911, %v1932
        %v1935 = vadd.f32 %v1912, %v1932
        %v1936 = vadd.f32 %v1913, %v1932
        %v1937 = vadd.f32 %v1914, %v1932
        %v1938 = vadd.f32 %v1915, %v1932
        %v1939 = vadd.f32 %v1916, %v1932
        %v1940 = vadd.f32 %v1917, %v1932
        %v1941 = vadd.f32 %v1918, %v1932
        %v1942 = vadd.f32 %v1919, %v1932
        %v1943 = vadd.f32 %v1920, %v1932
        %v1944 = vadd.f32 %v1921, %v1932
        %v1945 = vadd.f32 %v1922, %v1932
        %v1946 = vadd.f32 %v1923, %v1932
        %v1947 = vadd.f32 %v1924, %v1932
        %v1948 = vadd.f32 %v1925, %v1932
        %v1949 = vadd.f32 %v1926, %v1932
        %1950 = vst.msk [vmem:[%s258] sm:$0xff] %vm319, %v1934
        %1951 = vst.msk [vmem:[%s258 + $0x8] sm:$0xff] %vm319, %v1935
        %1952 = vst.msk [vmem:[%s258 + $0x10] sm:$0xff] %vm319, %v1936
        %1953 = vst.msk [vmem:[%s258 + $0x18] sm:$0xff] %vm319, %v1937
        %1954 = vst.msk [vmem:[%s258 + $0x20] sm:$0xff] %vm319, %v1938
        %1955 = vst.msk [vmem:[%s258 + $0x28] sm:$0xff] %vm319, %v1939
        %1956 = vst.msk [vmem:[%s258 + $0x30] sm:$0xff] %vm319, %v1940
        %1957 = vst.msk [vmem:[%s258 + $0x38] sm:$0xff] %vm319, %v1941
        %1958 = vst.msk [vmem:[%s258 + $0x40] sm:$0xff] %vm319, %v1942
        %1959 = vst.msk [vmem:[%s258 + $0x48] sm:$0xff] %vm319, %v1943
        %1960 = vst.msk [vmem:[%s258 + $0x50] sm:$0xff] %vm319, %v1944
        %1961 = vst.msk [vmem:[%s258 + $0x58] sm:$0xff] %vm319, %v1945
        %1962 = vst.msk [vmem:[%s258 + $0x60] sm:$0xff] %vm319, %v1946
        %1963 = vst.msk [vmem:[%s258 + $0x68] sm:$0xff] %vm319, %v1947
        %1964 = vst.msk [vmem:[%s258 + $0x70] sm:$0xff] %vm319, %v1948
        %1965 = vst.msk [vmem:[%s258 + $0x78] sm:$0xff] %vm319, %v1949
        %s1966 = sand.u32 %s145, 1
        %s1967 = scalar_lea.sflag [#allocation4], %s1966
        %s1968 = sand.u32 %s145, 1
        %s1969 = smul.addr %s1968, 128
        %s1970 = scalar_lea.vmem [#allocation5], %s1969
        // Predicated region
        $region45: #{tpu_custom_call.1} parent=39 // pred_check
          %p1971 = pneg %p155
        $region46: #{tpu_custom_call.1} parent=39 // pred_check_branch
          %1973 = sbr.rel (%p1971) target = $region48
        $region47: #{tpu_custom_call.1} parent=39 // pred_region
          %s1974 = smul.u32 16, %s22
          %s1976 = ssub.s32 2048, 2048
          %1977 = vsyncadd %s1967, %s1976
          %s1978 = smul.addr %s1974, 128
          %s1979 = scalar_lea.hbm %s5, %s1978
          %s1980 = sshll.u32 %s1970, 4
          %s1981 = int_to_ptr.vmem [resolvable:$true] %s1980
          %1986 = dma.vmem_to_hbm [thread:$0]  %s1981, 2048, %s1979, %s1967, 128, 128, 8
        $region48: #{tpu_custom_call.1} parent=39 // pred_fallthru
          _
      $region40: #{tpu_custom_call.1} parent=5 // pred_fallthru
        _
      %p1987 = scmp.le.s32.totalorder 2, %s17
      // Predicated region
      $region49: #{tpu_custom_call.1} parent=5 // pred_check
        %p1988 = pneg %p1987
      $region50: #{tpu_custom_call.1} parent=5 // pred_check_branch
        %1990 = sbr.rel (%p1988) target = $region52
      $region51: #{tpu_custom_call.1} parent=5 // pred_region
        %s1991 = ssub.s32 %s17, 2
        // Predicated region
        $region53: #{tpu_custom_call.1} parent=51 // pred_check
          %p1992 = pneg %p161
        $region54: #{tpu_custom_call.1} parent=51 // pred_check_branch
          %1994 = sbr.rel (%p1992) target = $region56
        $region55: #{tpu_custom_call.1} parent=51 // pred_region
          %s1995 = sand.u32 %s146, 1
          %s1996 = scalar_lea.sflag [#allocation4], %s1995
          %s1997 = sand.u32 %s146, 1
          %s1998 = smul.addr %s1997, 128
          %s1999 = scalar_lea.vmem [#allocation5], %s1998
          %2000 = dma.done %s1996, 2048
        $region56: #{tpu_custom_call.1} parent=51 // pred_fallthru
          _
      $region52: #{tpu_custom_call.1} parent=5 // pred_fallthru
        _
    $region6: #{tpu_custom_call.1} parent=1 // loop_footer
      %s21 = sadd.s32 1, %s17
    $region7: #{tpu_custom_call.1} parent=1 // loop_footer_branch
      %16 = sbr.rel target = $region3
    $region8: #{tpu_custom_call.1} parent=1 // loop_exit
      _
    %2001 = vsyncpa [#allocation3], 1
    %s2002 = scalar_lea.sflag [#allocation3], 1
    %2003 = vsyncpa %s2002, 1
    %2004 = vsyncpa [#allocation4], 1
    %s2005 = scalar_lea.sflag [#allocation4], 1
    %2006 = vsyncpa %s2005, 1

</llo_original>
